<compile_context>
chip_gen: v5e
topology: v5e:2x2
jax: 0.10.0
libtpu: 0.0.40
codegen_flags: <defaults>
</compile_context>

<pallas_src>
import functools
import math

import jax
import jax.numpy as jnp
from jax.experimental import pallas as pl
from jax.experimental.pallas import tpu as pltpu


# ---------------------------------------------------------------------------
# Fused kernel: depth x (3x3 conv + bias + ReLU) -> global mean pool -> linear
# head.  One image per grid step, activation layout (C, H*W).
# ---------------------------------------------------------------------------
def _threec_kernel(x_ref, wc_ref, bc_ref, wh_ref, bh_ref, m_ref, o_ref, *, W):
    # x_ref:  (1, C, HW)        one image; channels in sublanes, spatial in lanes
    # wc_ref: (depth, 9, C, C)  per-tap conv weights [layer, tap, cout, cin]
    # bc_ref: (depth, C, 1)     conv biases (broadcast over lanes)
    # wh_ref: (nc, C)           head weight^T, pre-scaled by 1/(H*W)
    # bh_ref: (nc, 1)           head bias
    # m_ref:  (9, HW)           0/1 border-validity mask per tap
    # o_ref:  (1, nc, 1)        logits for this image
    C, HW = x_ref.shape[1], x_ref.shape[2]
    depth = wc_ref.shape[0]

    act = x_ref[0]                                   # (C, HW), stays in vregs/VMEM
    masks = m_ref[...]                               # (9, HW), loaded once

    # Tap order matches weight/mask packing: tap = (dy+1)*3 + (dx+1).
    offsets = [dy * W + dx for dy in (-1, 0, 1) for dx in (-1, 0, 1)]

    for l in range(depth):
        acc = jnp.zeros((C, HW), jnp.float32)
        for tap, off in enumerate(offsets):
            if off == 0:
                shifted = act                        # center tap: no roll, no mask
            else:
                # rolled[:, s] = act[:, s + off] for in-bounds taps (mask guards the
                # wrap-around / out-of-image positions).  XLU lane rotate, no padded
                # scratch and no misaligned slices.
                shifted = pltpu.roll(act, (-off) % HW, 1)
            part = jnp.dot(wc_ref[l, tap], shifted,
                           preferred_element_type=jnp.float32)   # (C, HW) MXU dot
            if off == 0:
                acc = acc + part
            else:
                acc = acc + part * masks[tap:tap + 1, :]
        act = jnp.maximum(acc + bc_ref[l], 0.0)      # fused bias + ReLU, full-lane VPU

    # Epilogue: head matmul with full-width N = HW, then lane reduction = mean pool
    # (the 1/(H*W) scale is folded into wh), then bias.  Tiny (nc, 1) store.
    head = jnp.dot(wh_ref[...], act, preferred_element_type=jnp.float32)   # (nc, HW)
    o_ref[0] = jnp.sum(head, axis=-1, keepdims=True) + bh_ref[...]


# ---------------------------------------------------------------------------
# Parameter init (PyTorch Conv2d / Linear default init), packing, masks, forward.
# ---------------------------------------------------------------------------
def init_params(key, num_classes, depth=3, c=16, in_channels=3):
    params = {"convs": []}
    for i in range(depth):
        cin = in_channels if i == 0 else c
        key, k1, k2 = jax.random.split(key, 3)
        bound = 1.0 / math.sqrt(cin * 9)
        # PyTorch Conv2d weight layout: (Cout, Cin, kh, kw).
        w = jax.random.uniform(k1, (c, cin, 3, 3), jnp.float32, -bound, bound)
        b = jax.random.uniform(k2, (c,), jnp.float32, -bound, bound)
        params["convs"].append((w, b))
    key, k1, k2 = jax.random.split(key, 3)
    bound = 1.0 / math.sqrt(c)
    params["head_w"] = jax.random.uniform(k1, (c, num_classes), jnp.float32, -bound, bound)
    params["head_b"] = jax.random.uniform(k2, (num_classes,), jnp.float32, -bound, bound)
    return params


def _pack_params(params, H, W, C):
    """Per-tap conv weights (layer-0 cin zero-padded to C), column biases, and the head
    weight transposed with the 1/(H*W) mean-pool scale folded in.  Tiny trace-time ops."""
    wc, bc = [], []
    for (w_oihw, b) in params["convs"]:
        cout, cin = w_oihw.shape[0], w_oihw.shape[1]
        # (cout, cin, ky, kx) -> (ky, kx, cout, cin) -> (9, cout, cin)
        w_t = jnp.transpose(w_oihw, (2, 3, 0, 1)).reshape(9, cout, cin)
        if cin < C:
            w_t = jnp.pad(w_t, ((0, 0), (0, 0), (0, C - cin)))
        wc.append(w_t)                       # (9, C, C)
        bc.append(b.reshape(C, 1))
    wc = jnp.stack(wc)                       # (depth, 9, C, C)
    bc = jnp.stack(bc)                       # (depth, C, 1)
    wh_t = (params["head_w"] * (1.0 / float(H * W))).T     # (nc, C), pool scale folded
    bh_t = params["head_b"].reshape(-1, 1)                  # (nc, 1)
    return wc, bc, wh_t, bh_t


def _border_masks(H, W):
    """mask[tap, y*W+x] = 1 iff (y+dy, x+dx) is inside the image, tap=(dy+1)*3+(dx+1)."""
    ys, xs = jnp.meshgrid(jnp.arange(H), jnp.arange(W), indexing="ij")
    ys, xs = ys.reshape(-1), xs.reshape(-1)
    rows = []
    for dy in (-1, 0, 1):
        for dx in (-1, 0, 1):
            ok = ((ys + dy >= 0) & (ys + dy < H) & (xs + dx >= 0) & (xs + dx < W))
            rows.append(ok.astype(jnp.float32))
    return jnp.stack(rows)                   # (9, H*W)


@jax.jit
def threec_forward(params, x_nchw):
    B, cin0, H, W = x_nchw.shape
    C = params["convs"][0][0].shape[0]       # conv width (16)
    HW = H * W

    # NCHW is already (channels, flattened-spatial) per image: just reshape, then
    # zero-pad channels to C in the wrapper (review item 5).
    x = x_nchw.astype(jnp.float32).reshape(B, cin0, HW)
    if cin0 < C:
        x = jnp.pad(x, ((0, 0), (0, C - cin0), (0, 0)))

    wc, bc, wh_t, bh_t = _pack_params(params, H, W, C)
    masks = _border_masks(H, W)
    depth = wc.shape[0]
    num_classes = wh_t.shape[0]

    kernel = functools.partial(_threec_kernel, W=W)

    out = pl.pallas_call(
        kernel,
        out_shape=jax.ShapeDtypeStruct((B, num_classes, 1), jnp.float32),
        grid=(B,),
        in_specs=[
            pl.BlockSpec((1, C, HW), lambda b: (b, 0, 0)),            # image
            pl.BlockSpec((depth, 9, C, C), lambda b: (0, 0, 0, 0)),   # conv weights
            pl.BlockSpec((depth, C, 1), lambda b: (0, 0, 0)),         # conv biases
            pl.BlockSpec((num_classes, C), lambda b: (0, 0)),         # head weight^T
            pl.BlockSpec((num_classes, 1), lambda b: (0, 0)),         # head bias
            pl.BlockSpec((9, HW), lambda b: (0, 0)),                  # border masks
        ],
        out_specs=pl.BlockSpec((1, num_classes, 1), lambda b: (b, 0, 0)),
        compiler_params=pltpu.CompilerParams(
            dimension_semantics=("parallel",)),   # one image per TC on v7x
    )(x, wc, bc, wh_t, bh_t, masks)
    return out.reshape(B, num_classes)


# ---------------------------------------------------------------------------
# Pure-JAX reference (for a correctness smoke test).
# ---------------------------------------------------------------------------
def reference_forward(params, x_nchw):
    x = jnp.transpose(x_nchw, (0, 2, 3, 1)).astype(jnp.float32)   # NHWC
    B, H, W, _ = x.shape
    for (w_oihw, b) in params["convs"]:
        w_hwio = jnp.transpose(w_oihw, (2, 3, 1, 0))
        xp = jnp.pad(x, ((0, 0), (1, 1), (1, 1), (0, 0)))
        cout = w_hwio.shape[-1]
        out = jnp.zeros((B, H, W, cout), jnp.float32)
        for dy in range(3):
            for dx in range(3):
                out = out + jnp.einsum(
                    "bhwc,cd->bhwd", xp[:, dy:dy + H, dx:dx + W, :], w_hwio[dy, dx],
                    precision=jax.lax.Precision.HIGHEST)
        x = jnp.maximum(out + b, 0.0)
    pooled = x.mean(axis=(1, 2))
    return pooled @ params["head_w"] + params["head_b"]


if __name__ == "__main__":
    num_classes, depth, c, in_channels = 10, 3, 16, 3
    B, H, W = 2, 16, 16

    key = jax.random.PRNGKey(0)
    key, pkey, xkey = jax.random.split(key, 3)
    params = init_params(pkey, num_classes, depth=depth, c=c, in_channels=in_channels)
    x = jax.random.normal(xkey, (B, in_channels, H, W), jnp.float32)   # NCHW like PyTorch

    out = jax.block_until_ready(threec_forward(params, x))
    assert out.shape == (B, num_classes), out.shape
    assert bool(jnp.all(jnp.isfinite(out)))

    ref = jax.block_until_ready(reference_forward(params, x))
    assert jnp.allclose(out, ref, rtol=2e-2, atol=2e-3), (
        float(jnp.max(jnp.abs(out - ref))))
    print("KERNEL_OK")
</pallas_src>

<mosaic_0001>
module attributes {stable_mosaic.version = 11 : i64} {
  func.func @_threec_kernel(%arg0: i32, %arg1: memref<1x16x256xf32, #tpu.memory_space<vmem>>, %arg2: memref<3x9x16x16xf32, #tpu.memory_space<vmem>>, %arg3: memref<3x16x1xf32, #tpu.memory_space<vmem>>, %arg4: memref<10x16xf32, #tpu.memory_space<vmem>>, %arg5: memref<10x1xf32, #tpu.memory_space<vmem>>, %arg6: memref<9x256xf32, #tpu.memory_space<vmem>>, %arg7: memref<1x10x1xf32, #tpu.memory_space<vmem>>) attributes {dimension_semantics = [#tpu.dimension_semantics<parallel>], iteration_bounds = array<i64: 2>, scalar_prefetch = 0 : i64, scratch_operands = 0 : i64, tpu.core_type = #tpu.core_type<tc>, window_params = [{transform_indices = @transform_0, window_bounds = array<i64: 1, 16, 256>}, {pipeline_mode = #tpu.pipeline_mode<synchronous>, transform_indices = @transform_1, window_bounds = array<i64: 3, 9, 16, 16>}, {pipeline_mode = #tpu.pipeline_mode<synchronous>, transform_indices = @transform_2, window_bounds = array<i64: 3, 16, 1>}, {pipeline_mode = #tpu.pipeline_mode<synchronous>, transform_indices = @transform_3, window_bounds = array<i64: 10, 16>}, {pipeline_mode = #tpu.pipeline_mode<synchronous>, transform_indices = @transform_4, window_bounds = array<i64: 10, 1>}, {pipeline_mode = #tpu.pipeline_mode<synchronous>, transform_indices = @transform_5, window_bounds = array<i64: 9, 256>}, {transform_indices = @transform_6, window_bounds = array<i64: 1, 10, 1>}]} {
    %c0 = arith.constant 0 : index
    %c0_0 = arith.constant 0 : index
    %c0_1 = arith.constant 0 : index
    %0 = vector.load %arg1[%c0, %c0_0, %c0_1] : memref<1x16x256xf32, #tpu.memory_space<vmem>>, vector<1x16x256xf32>
    %1 = vector.shape_cast %0 : vector<1x16x256xf32> to vector<16x256xf32>
    %c0_2 = arith.constant 0 : index
    %c0_3 = arith.constant 0 : index
    %2 = vector.load %arg6[%c0_2, %c0_3] : memref<9x256xf32, #tpu.memory_space<vmem>>, vector<9x256xf32>
    %cst = arith.constant 0.000000e+00 : f32
    %3 = vector.broadcast %cst : f32 to vector<16x256xf32>
    %c17_i32 = arith.constant 17 : i32
    %4 = tpu.dynamic_rotate %1 by %c17_i32 dim 1 : vector<16x256xf32>, i32 -> vector<16x256xf32>
    %c0_4 = arith.constant 0 : index
    %c0_5 = arith.constant 0 : index
    %c0_6 = arith.constant 0 : index
    %c0_7 = arith.constant 0 : index
    %5 = vector.load %arg2[%c0_4, %c0_5, %c0_6, %c0_7] : memref<3x9x16x16xf32, #tpu.memory_space<vmem>>, vector<1x1x16x16xf32>
    %6 = vector.shape_cast %5 : vector<1x1x16x16xf32> to vector<16x16xf32>
    %cst_8 = arith.constant dense<0.000000e+00> : vector<16x256xf32>
    %7 = tpu.matmul %6, %4, %cst_8 {dimension_numbers = #tpu.dot_dimension_numbers<[1], [0], [0], [1], [0, 0, 1, 1], [], []>} : vector<16x16xf32>, vector<16x256xf32>, vector<16x256xf32> -> vector<16x256xf32>
    %8 = vector.extract_strided_slice %2 {offsets = [0, 0], sizes = [1, 256], strides = [1, 1]} : vector<9x256xf32> to vector<1x256xf32>
    %9 = vector.broadcast %8 : vector<1x256xf32> to vector<16x256xf32>
    %10 = arith.mulf %7, %9 : vector<16x256xf32>
    %11 = arith.addf %3, %10 : vector<16x256xf32>
    %c16_i32 = arith.constant 16 : i32
    %12 = tpu.dynamic_rotate %1 by %c16_i32 dim 1 : vector<16x256xf32>, i32 -> vector<16x256xf32>
    %c0_9 = arith.constant 0 : index
    %c1 = arith.constant 1 : index
    %c0_10 = arith.constant 0 : index
    %c0_11 = arith.constant 0 : index
    %13 = vector.load %arg2[%c0_9, %c1, %c0_10, %c0_11] : memref<3x9x16x16xf32, #tpu.memory_space<vmem>>, vector<1x1x16x16xf32>
    %14 = vector.shape_cast %13 : vector<1x1x16x16xf32> to vector<16x16xf32>
    %cst_12 = arith.constant dense<0.000000e+00> : vector<16x256xf32>
    %15 = tpu.matmul %14, %12, %cst_12 {dimension_numbers = #tpu.dot_dimension_numbers<[1], [0], [0], [1], [0, 0, 1, 1], [], []>} : vector<16x16xf32>, vector<16x256xf32>, vector<16x256xf32> -> vector<16x256xf32>
    %16 = vector.extract_strided_slice %2 {offsets = [1, 0], sizes = [1, 256], strides = [1, 1]} : vector<9x256xf32> to vector<1x256xf32>
    %17 = vector.broadcast %16 : vector<1x256xf32> to vector<16x256xf32>
    %18 = arith.mulf %15, %17 : vector<16x256xf32>
    %19 = arith.addf %11, %18 : vector<16x256xf32>
    %c15_i32 = arith.constant 15 : i32
    %20 = tpu.dynamic_rotate %1 by %c15_i32 dim 1 : vector<16x256xf32>, i32 -> vector<16x256xf32>
    %c0_13 = arith.constant 0 : index
    %c2 = arith.constant 2 : index
    %c0_14 = arith.constant 0 : index
    %c0_15 = arith.constant 0 : index
    %21 = vector.load %arg2[%c0_13, %c2, %c0_14, %c0_15] : memref<3x9x16x16xf32, #tpu.memory_space<vmem>>, vector<1x1x16x16xf32>
    %22 = vector.shape_cast %21 : vector<1x1x16x16xf32> to vector<16x16xf32>
    %cst_16 = arith.constant dense<0.000000e+00> : vector<16x256xf32>
    %23 = tpu.matmul %22, %20, %cst_16 {dimension_numbers = #tpu.dot_dimension_numbers<[1], [0], [0], [1], [0, 0, 1, 1], [], []>} : vector<16x16xf32>, vector<16x256xf32>, vector<16x256xf32> -> vector<16x256xf32>
    %24 = vector.extract_strided_slice %2 {offsets = [2, 0], sizes = [1, 256], strides = [1, 1]} : vector<9x256xf32> to vector<1x256xf32>
    %25 = vector.broadcast %24 : vector<1x256xf32> to vector<16x256xf32>
    %26 = arith.mulf %23, %25 : vector<16x256xf32>
    %27 = arith.addf %19, %26 : vector<16x256xf32>
    %c1_i32 = arith.constant 1 : i32
    %28 = tpu.dynamic_rotate %1 by %c1_i32 dim 1 : vector<16x256xf32>, i32 -> vector<16x256xf32>
    %c0_17 = arith.constant 0 : index
    %c3 = arith.constant 3 : index
    %c0_18 = arith.constant 0 : index
    %c0_19 = arith.constant 0 : index
    %29 = vector.load %arg2[%c0_17, %c3, %c0_18, %c0_19] : memref<3x9x16x16xf32, #tpu.memory_space<vmem>>, vector<1x1x16x16xf32>
    %30 = vector.shape_cast %29 : vector<1x1x16x16xf32> to vector<16x16xf32>
    %cst_20 = arith.constant dense<0.000000e+00> : vector<16x256xf32>
    %31 = tpu.matmul %30, %28, %cst_20 {dimension_numbers = #tpu.dot_dimension_numbers<[1], [0], [0], [1], [0, 0, 1, 1], [], []>} : vector<16x16xf32>, vector<16x256xf32>, vector<16x256xf32> -> vector<16x256xf32>
    %32 = vector.extract_strided_slice %2 {offsets = [3, 0], sizes = [1, 256], strides = [1, 1]} : vector<9x256xf32> to vector<1x256xf32>
    %33 = vector.broadcast %32 : vector<1x256xf32> to vector<16x256xf32>
    %34 = arith.mulf %31, %33 : vector<16x256xf32>
    %35 = arith.addf %27, %34 : vector<16x256xf32>
    %c0_21 = arith.constant 0 : index
    %c4 = arith.constant 4 : index
    %c0_22 = arith.constant 0 : index
    %c0_23 = arith.constant 0 : index
    %36 = vector.load %arg2[%c0_21, %c4, %c0_22, %c0_23] : memref<3x9x16x16xf32, #tpu.memory_space<vmem>>, vector<1x1x16x16xf32>
    %37 = vector.shape_cast %36 : vector<1x1x16x16xf32> to vector<16x16xf32>
    %cst_24 = arith.constant dense<0.000000e+00> : vector<16x256xf32>
    %38 = tpu.matmul %37, %1, %cst_24 {dimension_numbers = #tpu.dot_dimension_numbers<[1], [0], [0], [1], [0, 0, 1, 1], [], []>} : vector<16x16xf32>, vector<16x256xf32>, vector<16x256xf32> -> vector<16x256xf32>
    %39 = arith.addf %35, %38 : vector<16x256xf32>
    %c255_i32 = arith.constant 255 : i32
    %40 = tpu.dynamic_rotate %1 by %c255_i32 dim 1 : vector<16x256xf32>, i32 -> vector<16x256xf32>
    %c0_25 = arith.constant 0 : index
    %c5 = arith.constant 5 : index
    %c0_26 = arith.constant 0 : index
    %c0_27 = arith.constant 0 : index
    %41 = vector.load %arg2[%c0_25, %c5, %c0_26, %c0_27] : memref<3x9x16x16xf32, #tpu.memory_space<vmem>>, vector<1x1x16x16xf32>
    %42 = vector.shape_cast %41 : vector<1x1x16x16xf32> to vector<16x16xf32>
    %cst_28 = arith.constant dense<0.000000e+00> : vector<16x256xf32>
    %43 = tpu.matmul %42, %40, %cst_28 {dimension_numbers = #tpu.dot_dimension_numbers<[1], [0], [0], [1], [0, 0, 1, 1], [], []>} : vector<16x16xf32>, vector<16x256xf32>, vector<16x256xf32> -> vector<16x256xf32>
    %44 = vector.extract_strided_slice %2 {offsets = [5, 0], sizes = [1, 256], strides = [1, 1]} : vector<9x256xf32> to vector<1x256xf32>
    %45 = vector.broadcast %44 : vector<1x256xf32> to vector<16x256xf32>
    %46 = arith.mulf %43, %45 : vector<16x256xf32>
    %47 = arith.addf %39, %46 : vector<16x256xf32>
    %c241_i32 = arith.constant 241 : i32
    %48 = tpu.dynamic_rotate %1 by %c241_i32 dim 1 : vector<16x256xf32>, i32 -> vector<16x256xf32>
    %c0_29 = arith.constant 0 : index
    %c6 = arith.constant 6 : index
    %c0_30 = arith.constant 0 : index
    %c0_31 = arith.constant 0 : index
    %49 = vector.load %arg2[%c0_29, %c6, %c0_30, %c0_31] : memref<3x9x16x16xf32, #tpu.memory_space<vmem>>, vector<1x1x16x16xf32>
    %50 = vector.shape_cast %49 : vector<1x1x16x16xf32> to vector<16x16xf32>
    %cst_32 = arith.constant dense<0.000000e+00> : vector<16x256xf32>
    %51 = tpu.matmul %50, %48, %cst_32 {dimension_numbers = #tpu.dot_dimension_numbers<[1], [0], [0], [1], [0, 0, 1, 1], [], []>} : vector<16x16xf32>, vector<16x256xf32>, vector<16x256xf32> -> vector<16x256xf32>
    %52 = vector.extract_strided_slice %2 {offsets = [6, 0], sizes = [1, 256], strides = [1, 1]} : vector<9x256xf32> to vector<1x256xf32>
    %53 = vector.broadcast %52 : vector<1x256xf32> to vector<16x256xf32>
    %54 = arith.mulf %51, %53 : vector<16x256xf32>
    %55 = arith.addf %47, %54 : vector<16x256xf32>
    %c240_i32 = arith.constant 240 : i32
    %56 = tpu.dynamic_rotate %1 by %c240_i32 dim 1 : vector<16x256xf32>, i32 -> vector<16x256xf32>
    %c0_33 = arith.constant 0 : index
    %c7 = arith.constant 7 : index
    %c0_34 = arith.constant 0 : index
    %c0_35 = arith.constant 0 : index
    %57 = vector.load %arg2[%c0_33, %c7, %c0_34, %c0_35] : memref<3x9x16x16xf32, #tpu.memory_space<vmem>>, vector<1x1x16x16xf32>
    %58 = vector.shape_cast %57 : vector<1x1x16x16xf32> to vector<16x16xf32>
    %cst_36 = arith.constant dense<0.000000e+00> : vector<16x256xf32>
    %59 = tpu.matmul %58, %56, %cst_36 {dimension_numbers = #tpu.dot_dimension_numbers<[1], [0], [0], [1], [0, 0, 1, 1], [], []>} : vector<16x16xf32>, vector<16x256xf32>, vector<16x256xf32> -> vector<16x256xf32>
    %60 = vector.extract_strided_slice %2 {offsets = [7, 0], sizes = [1, 256], strides = [1, 1]} : vector<9x256xf32> to vector<1x256xf32>
    %61 = vector.broadcast %60 : vector<1x256xf32> to vector<16x256xf32>
    %62 = arith.mulf %59, %61 : vector<16x256xf32>
    %63 = arith.addf %55, %62 : vector<16x256xf32>
    %c239_i32 = arith.constant 239 : i32
    %64 = tpu.dynamic_rotate %1 by %c239_i32 dim 1 : vector<16x256xf32>, i32 -> vector<16x256xf32>
    %c0_37 = arith.constant 0 : index
    %c8 = arith.constant 8 : index
    %c0_38 = arith.constant 0 : index
    %c0_39 = arith.constant 0 : index
    %65 = vector.load %arg2[%c0_37, %c8, %c0_38, %c0_39] : memref<3x9x16x16xf32, #tpu.memory_space<vmem>>, vector<1x1x16x16xf32>
    %66 = vector.shape_cast %65 : vector<1x1x16x16xf32> to vector<16x16xf32>
    %cst_40 = arith.constant dense<0.000000e+00> : vector<16x256xf32>
    %67 = tpu.matmul %66, %64, %cst_40 {dimension_numbers = #tpu.dot_dimension_numbers<[1], [0], [0], [1], [0, 0, 1, 1], [], []>} : vector<16x16xf32>, vector<16x256xf32>, vector<16x256xf32> -> vector<16x256xf32>
    %68 = vector.extract_strided_slice %2 {offsets = [8, 0], sizes = [1, 256], strides = [1, 1]} : vector<9x256xf32> to vector<1x256xf32>
    %69 = vector.broadcast %68 : vector<1x256xf32> to vector<16x256xf32>
    %70 = arith.mulf %67, %69 : vector<16x256xf32>
    %71 = arith.addf %63, %70 : vector<16x256xf32>
    %c0_41 = arith.constant 0 : index
    %c0_42 = arith.constant 0 : index
    %c0_43 = arith.constant 0 : index
    %72 = vector.load %arg3[%c0_41, %c0_42, %c0_43] : memref<3x16x1xf32, #tpu.memory_space<vmem>>, vector<1x16x1xf32>
    %73 = vector.shape_cast %72 : vector<1x16x1xf32> to vector<16x1xf32>
    %74 = vector.broadcast %73 : vector<16x1xf32> to vector<16x256xf32>
    %75 = arith.addf %71, %74 : vector<16x256xf32>
    %cst_44 = arith.constant 0.000000e+00 : f32
    %76 = vector.broadcast %cst_44 : f32 to vector<16x256xf32>
    %77 = arith.maximumf %75, %76 : vector<16x256xf32>
    %cst_45 = arith.constant 0.000000e+00 : f32
    %78 = vector.broadcast %cst_45 : f32 to vector<16x256xf32>
    %c17_i32_46 = arith.constant 17 : i32
    %79 = tpu.dynamic_rotate %77 by %c17_i32_46 dim 1 : vector<16x256xf32>, i32 -> vector<16x256xf32>
    %c1_47 = arith.constant 1 : index
    %c0_48 = arith.constant 0 : index
    %c0_49 = arith.constant 0 : index
    %c0_50 = arith.constant 0 : index
    %80 = vector.load %arg2[%c1_47, %c0_48, %c0_49, %c0_50] : memref<3x9x16x16xf32, #tpu.memory_space<vmem>>, vector<1x1x16x16xf32>
    %81 = vector.shape_cast %80 : vector<1x1x16x16xf32> to vector<16x16xf32>
    %cst_51 = arith.constant dense<0.000000e+00> : vector<16x256xf32>
    %82 = tpu.matmul %81, %79, %cst_51 {dimension_numbers = #tpu.dot_dimension_numbers<[1], [0], [0], [1], [0, 0, 1, 1], [], []>} : vector<16x16xf32>, vector<16x256xf32>, vector<16x256xf32> -> vector<16x256xf32>
    %83 = vector.extract_strided_slice %2 {offsets = [0, 0], sizes = [1, 256], strides = [1, 1]} : vector<9x256xf32> to vector<1x256xf32>
    %84 = vector.broadcast %83 : vector<1x256xf32> to vector<16x256xf32>
    %85 = arith.mulf %82, %84 : vector<16x256xf32>
    %86 = arith.addf %78, %85 : vector<16x256xf32>
    %c16_i32_52 = arith.constant 16 : i32
    %87 = tpu.dynamic_rotate %77 by %c16_i32_52 dim 1 : vector<16x256xf32>, i32 -> vector<16x256xf32>
    %c1_53 = arith.constant 1 : index
    %c1_54 = arith.constant 1 : index
    %c0_55 = arith.constant 0 : index
    %c0_56 = arith.constant 0 : index
    %88 = vector.load %arg2[%c1_53, %c1_54, %c0_55, %c0_56] : memref<3x9x16x16xf32, #tpu.memory_space<vmem>>, vector<1x1x16x16xf32>
    %89 = vector.shape_cast %88 : vector<1x1x16x16xf32> to vector<16x16xf32>
    %cst_57 = arith.constant dense<0.000000e+00> : vector<16x256xf32>
    %90 = tpu.matmul %89, %87, %cst_57 {dimension_numbers = #tpu.dot_dimension_numbers<[1], [0], [0], [1], [0, 0, 1, 1], [], []>} : vector<16x16xf32>, vector<16x256xf32>, vector<16x256xf32> -> vector<16x256xf32>
    %91 = vector.extract_strided_slice %2 {offsets = [1, 0], sizes = [1, 256], strides = [1, 1]} : vector<9x256xf32> to vector<1x256xf32>
    %92 = vector.broadcast %91 : vector<1x256xf32> to vector<16x256xf32>
    %93 = arith.mulf %90, %92 : vector<16x256xf32>
    %94 = arith.addf %86, %93 : vector<16x256xf32>
    %c15_i32_58 = arith.constant 15 : i32
    %95 = tpu.dynamic_rotate %77 by %c15_i32_58 dim 1 : vector<16x256xf32>, i32 -> vector<16x256xf32>
    %c1_59 = arith.constant 1 : index
    %c2_60 = arith.constant 2 : index
    %c0_61 = arith.constant 0 : index
    %c0_62 = arith.constant 0 : index
    %96 = vector.load %arg2[%c1_59, %c2_60, %c0_61, %c0_62] : memref<3x9x16x16xf32, #tpu.memory_space<vmem>>, vector<1x1x16x16xf32>
    %97 = vector.shape_cast %96 : vector<1x1x16x16xf32> to vector<16x16xf32>
    %cst_63 = arith.constant dense<0.000000e+00> : vector<16x256xf32>
    %98 = tpu.matmul %97, %95, %cst_63 {dimension_numbers = #tpu.dot_dimension_numbers<[1], [0], [0], [1], [0, 0, 1, 1], [], []>} : vector<16x16xf32>, vector<16x256xf32>, vector<16x256xf32> -> vector<16x256xf32>
    %99 = vector.extract_strided_slice %2 {offsets = [2, 0], sizes = [1, 256], strides = [1, 1]} : vector<9x256xf32> to vector<1x256xf32>
    %100 = vector.broadcast %99 : vector<1x256xf32> to vector<16x256xf32>
    %101 = arith.mulf %98, %100 : vector<16x256xf32>
    %102 = arith.addf %94, %101 : vector<16x256xf32>
    %c1_i32_64 = arith.constant 1 : i32
    %103 = tpu.dynamic_rotate %77 by %c1_i32_64 dim 1 : vector<16x256xf32>, i32 -> vector<16x256xf32>
    %c1_65 = arith.constant 1 : index
    %c3_66 = arith.constant 3 : index
    %c0_67 = arith.constant 0 : index
    %c0_68 = arith.constant 0 : index
    %104 = vector.load %arg2[%c1_65, %c3_66, %c0_67, %c0_68] : memref<3x9x16x16xf32, #tpu.memory_space<vmem>>, vector<1x1x16x16xf32>
    %105 = vector.shape_cast %104 : vector<1x1x16x16xf32> to vector<16x16xf32>
    %cst_69 = arith.constant dense<0.000000e+00> : vector<16x256xf32>
    %106 = tpu.matmul %105, %103, %cst_69 {dimension_numbers = #tpu.dot_dimension_numbers<[1], [0], [0], [1], [0, 0, 1, 1], [], []>} : vector<16x16xf32>, vector<16x256xf32>, vector<16x256xf32> -> vector<16x256xf32>
    %107 = vector.extract_strided_slice %2 {offsets = [3, 0], sizes = [1, 256], strides = [1, 1]} : vector<9x256xf32> to vector<1x256xf32>
    %108 = vector.broadcast %107 : vector<1x256xf32> to vector<16x256xf32>
    %109 = arith.mulf %106, %108 : vector<16x256xf32>
    %110 = arith.addf %102, %109 : vector<16x256xf32>
    %c1_70 = arith.constant 1 : index
    %c4_71 = arith.constant 4 : index
    %c0_72 = arith.constant 0 : index
    %c0_73 = arith.constant 0 : index
    %111 = vector.load %arg2[%c1_70, %c4_71, %c0_72, %c0_73] : memref<3x9x16x16xf32, #tpu.memory_space<vmem>>, vector<1x1x16x16xf32>
    %112 = vector.shape_cast %111 : vector<1x1x16x16xf32> to vector<16x16xf32>
    %cst_74 = arith.constant dense<0.000000e+00> : vector<16x256xf32>
    %113 = tpu.matmul %112, %77, %cst_74 {dimension_numbers = #tpu.dot_dimension_numbers<[1], [0], [0], [1], [0, 0, 1, 1], [], []>} : vector<16x16xf32>, vector<16x256xf32>, vector<16x256xf32> -> vector<16x256xf32>
    %114 = arith.addf %110, %113 : vector<16x256xf32>
    %c255_i32_75 = arith.constant 255 : i32
    %115 = tpu.dynamic_rotate %77 by %c255_i32_75 dim 1 : vector<16x256xf32>, i32 -> vector<16x256xf32>
    %c1_76 = arith.constant 1 : index
    %c5_77 = arith.constant 5 : index
    %c0_78 = arith.constant 0 : index
    %c0_79 = arith.constant 0 : index
    %116 = vector.load %arg2[%c1_76, %c5_77, %c0_78, %c0_79] : memref<3x9x16x16xf32, #tpu.memory_space<vmem>>, vector<1x1x16x16xf32>
    %117 = vector.shape_cast %116 : vector<1x1x16x16xf32> to vector<16x16xf32>
    %cst_80 = arith.constant dense<0.000000e+00> : vector<16x256xf32>
    %118 = tpu.matmul %117, %115, %cst_80 {dimension_numbers = #tpu.dot_dimension_numbers<[1], [0], [0], [1], [0, 0, 1, 1], [], []>} : vector<16x16xf32>, vector<16x256xf32>, vector<16x256xf32> -> vector<16x256xf32>
    %119 = vector.extract_strided_slice %2 {offsets = [5, 0], sizes = [1, 256], strides = [1, 1]} : vector<9x256xf32> to vector<1x256xf32>
    %120 = vector.broadcast %119 : vector<1x256xf32> to vector<16x256xf32>
    %121 = arith.mulf %118, %120 : vector<16x256xf32>
    %122 = arith.addf %114, %121 : vector<16x256xf32>
    %c241_i32_81 = arith.constant 241 : i32
    %123 = tpu.dynamic_rotate %77 by %c241_i32_81 dim 1 : vector<16x256xf32>, i32 -> vector<16x256xf32>
    %c1_82 = arith.constant 1 : index
    %c6_83 = arith.constant 6 : index
    %c0_84 = arith.constant 0 : index
    %c0_85 = arith.constant 0 : index
    %124 = vector.load %arg2[%c1_82, %c6_83, %c0_84, %c0_85] : memref<3x9x16x16xf32, #tpu.memory_space<vmem>>, vector<1x1x16x16xf32>
    %125 = vector.shape_cast %124 : vector<1x1x16x16xf32> to vector<16x16xf32>
    %cst_86 = arith.constant dense<0.000000e+00> : vector<16x256xf32>
    %126 = tpu.matmul %125, %123, %cst_86 {dimension_numbers = #tpu.dot_dimension_numbers<[1], [0], [0], [1], [0, 0, 1, 1], [], []>} : vector<16x16xf32>, vector<16x256xf32>, vector<16x256xf32> -> vector<16x256xf32>
    %127 = vector.extract_strided_slice %2 {offsets = [6, 0], sizes = [1, 256], strides = [1, 1]} : vector<9x256xf32> to vector<1x256xf32>
    %128 = vector.broadcast %127 : vector<1x256xf32> to vector<16x256xf32>
    %129 = arith.mulf %126, %128 : vector<16x256xf32>
    %130 = arith.addf %122, %129 : vector<16x256xf32>
    %c240_i32_87 = arith.constant 240 : i32
    %131 = tpu.dynamic_rotate %77 by %c240_i32_87 dim 1 : vector<16x256xf32>, i32 -> vector<16x256xf32>
    %c1_88 = arith.constant 1 : index
    %c7_89 = arith.constant 7 : index
    %c0_90 = arith.constant 0 : index
    %c0_91 = arith.constant 0 : index
    %132 = vector.load %arg2[%c1_88, %c7_89, %c0_90, %c0_91] : memref<3x9x16x16xf32, #tpu.memory_space<vmem>>, vector<1x1x16x16xf32>
    %133 = vector.shape_cast %132 : vector<1x1x16x16xf32> to vector<16x16xf32>
    %cst_92 = arith.constant dense<0.000000e+00> : vector<16x256xf32>
    %134 = tpu.matmul %133, %131, %cst_92 {dimension_numbers = #tpu.dot_dimension_numbers<[1], [0], [0], [1], [0, 0, 1, 1], [], []>} : vector<16x16xf32>, vector<16x256xf32>, vector<16x256xf32> -> vector<16x256xf32>
    %135 = vector.extract_strided_slice %2 {offsets = [7, 0], sizes = [1, 256], strides = [1, 1]} : vector<9x256xf32> to vector<1x256xf32>
    %136 = vector.broadcast %135 : vector<1x256xf32> to vector<16x256xf32>
    %137 = arith.mulf %134, %136 : vector<16x256xf32>
    %138 = arith.addf %130, %137 : vector<16x256xf32>
    %c239_i32_93 = arith.constant 239 : i32
    %139 = tpu.dynamic_rotate %77 by %c239_i32_93 dim 1 : vector<16x256xf32>, i32 -> vector<16x256xf32>
    %c1_94 = arith.constant 1 : index
    %c8_95 = arith.constant 8 : index
    %c0_96 = arith.constant 0 : index
    %c0_97 = arith.constant 0 : index
    %140 = vector.load %arg2[%c1_94, %c8_95, %c0_96, %c0_97] : memref<3x9x16x16xf32, #tpu.memory_space<vmem>>, vector<1x1x16x16xf32>
    %141 = vector.shape_cast %140 : vector<1x1x16x16xf32> to vector<16x16xf32>
    %cst_98 = arith.constant dense<0.000000e+00> : vector<16x256xf32>
    %142 = tpu.matmul %141, %139, %cst_98 {dimension_numbers = #tpu.dot_dimension_numbers<[1], [0], [0], [1], [0, 0, 1, 1], [], []>} : vector<16x16xf32>, vector<16x256xf32>, vector<16x256xf32> -> vector<16x256xf32>
    %143 = vector.extract_strided_slice %2 {offsets = [8, 0], sizes = [1, 256], strides = [1, 1]} : vector<9x256xf32> to vector<1x256xf32>
    %144 = vector.broadcast %143 : vector<1x256xf32> to vector<16x256xf32>
    %145 = arith.mulf %142, %144 : vector<16x256xf32>
    %146 = arith.addf %138, %145 : vector<16x256xf32>
    %c1_99 = arith.constant 1 : index
    %c0_100 = arith.constant 0 : index
    %c0_101 = arith.constant 0 : index
    %147 = vector.load %arg3[%c1_99, %c0_100, %c0_101] : memref<3x16x1xf32, #tpu.memory_space<vmem>>, vector<1x16x1xf32>
    %148 = vector.shape_cast %147 : vector<1x16x1xf32> to vector<16x1xf32>
    %149 = vector.broadcast %148 : vector<16x1xf32> to vector<16x256xf32>
    %150 = arith.addf %146, %149 : vector<16x256xf32>
    %cst_102 = arith.constant 0.000000e+00 : f32
    %151 = vector.broadcast %cst_102 : f32 to vector<16x256xf32>
    %152 = arith.maximumf %150, %151 : vector<16x256xf32>
    %cst_103 = arith.constant 0.000000e+00 : f32
    %153 = vector.broadcast %cst_103 : f32 to vector<16x256xf32>
    %c17_i32_104 = arith.constant 17 : i32
    %154 = tpu.dynamic_rotate %152 by %c17_i32_104 dim 1 : vector<16x256xf32>, i32 -> vector<16x256xf32>
    %c2_105 = arith.constant 2 : index
    %c0_106 = arith.constant 0 : index
    %c0_107 = arith.constant 0 : index
    %c0_108 = arith.constant 0 : index
    %155 = vector.load %arg2[%c2_105, %c0_106, %c0_107, %c0_108] : memref<3x9x16x16xf32, #tpu.memory_space<vmem>>, vector<1x1x16x16xf32>
    %156 = vector.shape_cast %155 : vector<1x1x16x16xf32> to vector<16x16xf32>
    %cst_109 = arith.constant dense<0.000000e+00> : vector<16x256xf32>
    %157 = tpu.matmul %156, %154, %cst_109 {dimension_numbers = #tpu.dot_dimension_numbers<[1], [0], [0], [1], [0, 0, 1, 1], [], []>} : vector<16x16xf32>, vector<16x256xf32>, vector<16x256xf32> -> vector<16x256xf32>
    %158 = vector.extract_strided_slice %2 {offsets = [0, 0], sizes = [1, 256], strides = [1, 1]} : vector<9x256xf32> to vector<1x256xf32>
    %159 = vector.broadcast %158 : vector<1x256xf32> to vector<16x256xf32>
    %160 = arith.mulf %157, %159 : vector<16x256xf32>
    %161 = arith.addf %153, %160 : vector<16x256xf32>
    %c16_i32_110 = arith.constant 16 : i32
    %162 = tpu.dynamic_rotate %152 by %c16_i32_110 dim 1 : vector<16x256xf32>, i32 -> vector<16x256xf32>
    %c2_111 = arith.constant 2 : index
    %c1_112 = arith.constant 1 : index
    %c0_113 = arith.constant 0 : index
    %c0_114 = arith.constant 0 : index
    %163 = vector.load %arg2[%c2_111, %c1_112, %c0_113, %c0_114] : memref<3x9x16x16xf32, #tpu.memory_space<vmem>>, vector<1x1x16x16xf32>
    %164 = vector.shape_cast %163 : vector<1x1x16x16xf32> to vector<16x16xf32>
    %cst_115 = arith.constant dense<0.000000e+00> : vector<16x256xf32>
    %165 = tpu.matmul %164, %162, %cst_115 {dimension_numbers = #tpu.dot_dimension_numbers<[1], [0], [0], [1], [0, 0, 1, 1], [], []>} : vector<16x16xf32>, vector<16x256xf32>, vector<16x256xf32> -> vector<16x256xf32>
    %166 = vector.extract_strided_slice %2 {offsets = [1, 0], sizes = [1, 256], strides = [1, 1]} : vector<9x256xf32> to vector<1x256xf32>
    %167 = vector.broadcast %166 : vector<1x256xf32> to vector<16x256xf32>
    %168 = arith.mulf %165, %167 : vector<16x256xf32>
    %169 = arith.addf %161, %168 : vector<16x256xf32>
    %c15_i32_116 = arith.constant 15 : i32
    %170 = tpu.dynamic_rotate %152 by %c15_i32_116 dim 1 : vector<16x256xf32>, i32 -> vector<16x256xf32>
    %c2_117 = arith.constant 2 : index
    %c2_118 = arith.constant 2 : index
    %c0_119 = arith.constant 0 : index
    %c0_120 = arith.constant 0 : index
    %171 = vector.load %arg2[%c2_117, %c2_118, %c0_119, %c0_120] : memref<3x9x16x16xf32, #tpu.memory_space<vmem>>, vector<1x1x16x16xf32>
    %172 = vector.shape_cast %171 : vector<1x1x16x16xf32> to vector<16x16xf32>
    %cst_121 = arith.constant dense<0.000000e+00> : vector<16x256xf32>
    %173 = tpu.matmul %172, %170, %cst_121 {dimension_numbers = #tpu.dot_dimension_numbers<[1], [0], [0], [1], [0, 0, 1, 1], [], []>} : vector<16x16xf32>, vector<16x256xf32>, vector<16x256xf32> -> vector<16x256xf32>
    %174 = vector.extract_strided_slice %2 {offsets = [2, 0], sizes = [1, 256], strides = [1, 1]} : vector<9x256xf32> to vector<1x256xf32>
    %175 = vector.broadcast %174 : vector<1x256xf32> to vector<16x256xf32>
    %176 = arith.mulf %173, %175 : vector<16x256xf32>
    %177 = arith.addf %169, %176 : vector<16x256xf32>
    %c1_i32_122 = arith.constant 1 : i32
    %178 = tpu.dynamic_rotate %152 by %c1_i32_122 dim 1 : vector<16x256xf32>, i32 -> vector<16x256xf32>
    %c2_123 = arith.constant 2 : index
    %c3_124 = arith.constant 3 : index
    %c0_125 = arith.constant 0 : index
    %c0_126 = arith.constant 0 : index
    %179 = vector.load %arg2[%c2_123, %c3_124, %c0_125, %c0_126] : memref<3x9x16x16xf32, #tpu.memory_space<vmem>>, vector<1x1x16x16xf32>
    %180 = vector.shape_cast %179 : vector<1x1x16x16xf32> to vector<16x16xf32>
    %cst_127 = arith.constant dense<0.000000e+00> : vector<16x256xf32>
    %181 = tpu.matmul %180, %178, %cst_127 {dimension_numbers = #tpu.dot_dimension_numbers<[1], [0], [0], [1], [0, 0, 1, 1], [], []>} : vector<16x16xf32>, vector<16x256xf32>, vector<16x256xf32> -> vector<16x256xf32>
    %182 = vector.extract_strided_slice %2 {offsets = [3, 0], sizes = [1, 256], strides = [1, 1]} : vector<9x256xf32> to vector<1x256xf32>
    %183 = vector.broadcast %182 : vector<1x256xf32> to vector<16x256xf32>
    %184 = arith.mulf %181, %183 : vector<16x256xf32>
    %185 = arith.addf %177, %184 : vector<16x256xf32>
    %c2_128 = arith.constant 2 : index
    %c4_129 = arith.constant 4 : index
    %c0_130 = arith.constant 0 : index
    %c0_131 = arith.constant 0 : index
    %186 = vector.load %arg2[%c2_128, %c4_129, %c0_130, %c0_131] : memref<3x9x16x16xf32, #tpu.memory_space<vmem>>, vector<1x1x16x16xf32>
    %187 = vector.shape_cast %186 : vector<1x1x16x16xf32> to vector<16x16xf32>
    %cst_132 = arith.constant dense<0.000000e+00> : vector<16x256xf32>
    %188 = tpu.matmul %187, %152, %cst_132 {dimension_numbers = #tpu.dot_dimension_numbers<[1], [0], [0], [1], [0, 0, 1, 1], [], []>} : vector<16x16xf32>, vector<16x256xf32>, vector<16x256xf32> -> vector<16x256xf32>
    %189 = arith.addf %185, %188 : vector<16x256xf32>
    %c255_i32_133 = arith.constant 255 : i32
    %190 = tpu.dynamic_rotate %152 by %c255_i32_133 dim 1 : vector<16x256xf32>, i32 -> vector<16x256xf32>
    %c2_134 = arith.constant 2 : index
    %c5_135 = arith.constant 5 : index
    %c0_136 = arith.constant 0 : index
    %c0_137 = arith.constant 0 : index
    %191 = vector.load %arg2[%c2_134, %c5_135, %c0_136, %c0_137] : memref<3x9x16x16xf32, #tpu.memory_space<vmem>>, vector<1x1x16x16xf32>
    %192 = vector.shape_cast %191 : vector<1x1x16x16xf32> to vector<16x16xf32>
    %cst_138 = arith.constant dense<0.000000e+00> : vector<16x256xf32>
    %193 = tpu.matmul %192, %190, %cst_138 {dimension_numbers = #tpu.dot_dimension_numbers<[1], [0], [0], [1], [0, 0, 1, 1], [], []>} : vector<16x16xf32>, vector<16x256xf32>, vector<16x256xf32> -> vector<16x256xf32>
    %194 = vector.extract_strided_slice %2 {offsets = [5, 0], sizes = [1, 256], strides = [1, 1]} : vector<9x256xf32> to vector<1x256xf32>
    %195 = vector.broadcast %194 : vector<1x256xf32> to vector<16x256xf32>
    %196 = arith.mulf %193, %195 : vector<16x256xf32>
    %197 = arith.addf %189, %196 : vector<16x256xf32>
    %c241_i32_139 = arith.constant 241 : i32
    %198 = tpu.dynamic_rotate %152 by %c241_i32_139 dim 1 : vector<16x256xf32>, i32 -> vector<16x256xf32>
    %c2_140 = arith.constant 2 : index
    %c6_141 = arith.constant 6 : index
    %c0_142 = arith.constant 0 : index
    %c0_143 = arith.constant 0 : index
    %199 = vector.load %arg2[%c2_140, %c6_141, %c0_142, %c0_143] : memref<3x9x16x16xf32, #tpu.memory_space<vmem>>, vector<1x1x16x16xf32>
    %200 = vector.shape_cast %199 : vector<1x1x16x16xf32> to vector<16x16xf32>
    %cst_144 = arith.constant dense<0.000000e+00> : vector<16x256xf32>
    %201 = tpu.matmul %200, %198, %cst_144 {dimension_numbers = #tpu.dot_dimension_numbers<[1], [0], [0], [1], [0, 0, 1, 1], [], []>} : vector<16x16xf32>, vector<16x256xf32>, vector<16x256xf32> -> vector<16x256xf32>
    %202 = vector.extract_strided_slice %2 {offsets = [6, 0], sizes = [1, 256], strides = [1, 1]} : vector<9x256xf32> to vector<1x256xf32>
    %203 = vector.broadcast %202 : vector<1x256xf32> to vector<16x256xf32>
    %204 = arith.mulf %201, %203 : vector<16x256xf32>
    %205 = arith.addf %197, %204 : vector<16x256xf32>
    %c240_i32_145 = arith.constant 240 : i32
    %206 = tpu.dynamic_rotate %152 by %c240_i32_145 dim 1 : vector<16x256xf32>, i32 -> vector<16x256xf32>
    %c2_146 = arith.constant 2 : index
    %c7_147 = arith.constant 7 : index
    %c0_148 = arith.constant 0 : index
    %c0_149 = arith.constant 0 : index
    %207 = vector.load %arg2[%c2_146, %c7_147, %c0_148, %c0_149] : memref<3x9x16x16xf32, #tpu.memory_space<vmem>>, vector<1x1x16x16xf32>
    %208 = vector.shape_cast %207 : vector<1x1x16x16xf32> to vector<16x16xf32>
    %cst_150 = arith.constant dense<0.000000e+00> : vector<16x256xf32>
    %209 = tpu.matmul %208, %206, %cst_150 {dimension_numbers = #tpu.dot_dimension_numbers<[1], [0], [0], [1], [0, 0, 1, 1], [], []>} : vector<16x16xf32>, vector<16x256xf32>, vector<16x256xf32> -> vector<16x256xf32>
    %210 = vector.extract_strided_slice %2 {offsets = [7, 0], sizes = [1, 256], strides = [1, 1]} : vector<9x256xf32> to vector<1x256xf32>
    %211 = vector.broadcast %210 : vector<1x256xf32> to vector<16x256xf32>
    %212 = arith.mulf %209, %211 : vector<16x256xf32>
    %213 = arith.addf %205, %212 : vector<16x256xf32>
    %c239_i32_151 = arith.constant 239 : i32
    %214 = tpu.dynamic_rotate %152 by %c239_i32_151 dim 1 : vector<16x256xf32>, i32 -> vector<16x256xf32>
    %c2_152 = arith.constant 2 : index
    %c8_153 = arith.constant 8 : index
    %c0_154 = arith.constant 0 : index
    %c0_155 = arith.constant 0 : index
    %215 = vector.load %arg2[%c2_152, %c8_153, %c0_154, %c0_155] : memref<3x9x16x16xf32, #tpu.memory_space<vmem>>, vector<1x1x16x16xf32>
    %216 = vector.shape_cast %215 : vector<1x1x16x16xf32> to vector<16x16xf32>
    %cst_156 = arith.constant dense<0.000000e+00> : vector<16x256xf32>
    %217 = tpu.matmul %216, %214, %cst_156 {dimension_numbers = #tpu.dot_dimension_numbers<[1], [0], [0], [1], [0, 0, 1, 1], [], []>} : vector<16x16xf32>, vector<16x256xf32>, vector<16x256xf32> -> vector<16x256xf32>
    %218 = vector.extract_strided_slice %2 {offsets = [8, 0], sizes = [1, 256], strides = [1, 1]} : vector<9x256xf32> to vector<1x256xf32>
    %219 = vector.broadcast %218 : vector<1x256xf32> to vector<16x256xf32>
    %220 = arith.mulf %217, %219 : vector<16x256xf32>
    %221 = arith.addf %213, %220 : vector<16x256xf32>
    %c2_157 = arith.constant 2 : index
    %c0_158 = arith.constant 0 : index
    %c0_159 = arith.constant 0 : index
    %222 = vector.load %arg3[%c2_157, %c0_158, %c0_159] : memref<3x16x1xf32, #tpu.memory_space<vmem>>, vector<1x16x1xf32>
    %223 = vector.shape_cast %222 : vector<1x16x1xf32> to vector<16x1xf32>
    %224 = vector.broadcast %223 : vector<16x1xf32> to vector<16x256xf32>
    %225 = arith.addf %221, %224 : vector<16x256xf32>
    %cst_160 = arith.constant 0.000000e+00 : f32
    %226 = vector.broadcast %cst_160 : f32 to vector<16x256xf32>
    %227 = arith.maximumf %225, %226 : vector<16x256xf32>
    %c0_161 = arith.constant 0 : index
    %c0_162 = arith.constant 0 : index
    %228 = vector.load %arg4[%c0_161, %c0_162] : memref<10x16xf32, #tpu.memory_space<vmem>>, vector<10x16xf32>
    %cst_163 = arith.constant dense<0.000000e+00> : vector<10x256xf32>
    %229 = tpu.matmul %228, %227, %cst_163 {dimension_numbers = #tpu.dot_dimension_numbers<[1], [0], [0], [1], [0, 0, 1, 1], [], []>} : vector<10x16xf32>, vector<16x256xf32>, vector<10x256xf32> -> vector<10x256xf32>
    %cst_164 = arith.constant dense<0.000000e+00> : vector<10xf32>
    %230 = vector.multi_reduction <add>, %229, %cst_164 [1] : vector<10x256xf32> to vector<10xf32>
    %231 = vector.shape_cast %230 : vector<10xf32> to vector<10x1xf32>
    %c0_165 = arith.constant 0 : index
    %c0_166 = arith.constant 0 : index
    %232 = vector.load %arg5[%c0_165, %c0_166] : memref<10x1xf32, #tpu.memory_space<vmem>>, vector<10x1xf32>
    %233 = arith.addf %231, %232 : vector<10x1xf32>
    %c0_167 = arith.constant 0 : index
    %c0_168 = arith.constant 0 : index
    %c0_169 = arith.constant 0 : index
    %234 = vector.load %arg7[%c0_167, %c0_168, %c0_169] : memref<1x10x1xf32, #tpu.memory_space<vmem>>, vector<1x10x1xf32>
    %235 = vector.shape_cast %234 : vector<1x10x1xf32> to vector<10x1xf32>
    %236 = vector.shape_cast %233 : vector<10x1xf32> to vector<1x10x1xf32>
    tpu.vector_store %arg7[%c0_167, %c0_168, %c0_169], %236 {strides = array<i32>} : memref<1x10x1xf32, #tpu.memory_space<vmem>>, vector<1x10x1xf32>,
    return
  }
  func.func @transform_0(%arg0: i32) -> (i32, i32, i32) {
    %c0_i32 = arith.constant 0 : i32
    %c0_i32_0 = arith.constant 0 : i32
    %c0_i32_1 = arith.constant 0 : i32
    return %arg0, %c0_i32, %c0_i32_0 : i32, i32, i32
  }
  func.func @transform_1(%arg0: i32) -> (i32, i32, i32, i32) {
    %c0_i32 = arith.constant 0 : i32
    %c0_i32_0 = arith.constant 0 : i32
    %c0_i32_1 = arith.constant 0 : i32
    %c0_i32_2 = arith.constant 0 : i32
    %c0_i32_3 = arith.constant 0 : i32
    return %c0_i32, %c0_i32_0, %c0_i32_1, %c0_i32_2 : i32, i32, i32, i32
  }
  func.func @transform_2(%arg0: i32) -> (i32, i32, i32) {
    %c0_i32 = arith.constant 0 : i32
    %c0_i32_0 = arith.constant 0 : i32
    %c0_i32_1 = arith.constant 0 : i32
    %c0_i32_2 = arith.constant 0 : i32
    return %c0_i32, %c0_i32_0, %c0_i32_1 : i32, i32, i32
  }
  func.func @transform_3(%arg0: i32) -> (i32, i32) {
    %c0_i32 = arith.constant 0 : i32
    %c0_i32_0 = arith.constant 0 : i32
    %c0_i32_1 = arith.constant 0 : i32
    return %c0_i32, %c0_i32_0 : i32, i32
  }
  func.func @transform_4(%arg0: i32) -> (i32, i32) {
    %c0_i32 = arith.constant 0 : i32
    %c0_i32_0 = arith.constant 0 : i32
    %c0_i32_1 = arith.constant 0 : i32
    return %c0_i32, %c0_i32_0 : i32, i32
  }
  func.func @transform_5(%arg0: i32) -> (i32, i32) {
    %c0_i32 = arith.constant 0 : i32
    %c0_i32_0 = arith.constant 0 : i32
    %c0_i32_1 = arith.constant 0 : i32
    return %c0_i32, %c0_i32_0 : i32, i32
  }
  func.func @transform_6(%arg0: i32) -> (i32, i32, i32) {
    %c0_i32 = arith.constant 0 : i32
    %c0_i32_0 = arith.constant 0 : i32
    %c0_i32_1 = arith.constant 0 : i32
    return %arg0, %c0_i32, %c0_i32_0 : i32, i32, i32
  }
}

</mosaic_0001>

<llo_original>
// kernel: threec_forward.1
$region0: #{threec_forward.1}
  #allocation0 [shape = 'u32[]', space=smem, size = 0x4, offset = 0x4, fixed_abs, tag = 'smem constant byte address 0x4 - core index']
  #allocation1 [shape = 'u32[72,128]{1,0:T(1,128)}', space=vmem, size = 0x9000, scoped, tag = 'internal scratch']
  %s0 = inlined_call_operand.vmem [shape: f32[2,16,256], index: 0, kind: input, shape index: {}]
  %s1 = inlined_call_operand.vmem [shape: f32[3,9,16,16], index: 1, kind: input, shape index: {}]
  %s2 = inlined_call_operand.vmem [shape: f32[3,16,1], index: 2, kind: input, shape index: {}]
  %s3 = inlined_call_operand.vmem [shape: f32[10,16], index: 3, kind: input, shape index: {}]
  %s4 = inlined_call_operand.vmem [shape: f32[10,1], index: 4, kind: input, shape index: {}]
  %s5 = inlined_call_operand.vmem [shape: f32[9,256], index: 5, kind: input, shape index: {}]
  %s6 = inlined_call_operand.vmem [shape: f32[2,10,1], index: 6, kind: output, shape index: {}]
  %s7 = sld [smem:[#allocation0]]
  $region57: #{threec_forward.1} parent=0
    _
  %s9 = ssub.s32 1, %s7
  %s10 = scalar_select 0, %s9, %s7
  loop: start=0, step=1, limit=4
  $region2: #{threec_forward.1} parent=0 // loop_pre_header
    _
  $region3: #{threec_forward.1} parent=0 // loop_header
    %s12 = sphi 0, %s16
    %p13 = scmp.ge.s32.totalorder %s12, 4
    %s22 = sphi 0, %s24
    %s25 = sphi 0, %s22
    %s26 = sphi 0, %s25
    %s42 = sphi 0, %s26
    %s46 = sphi 0, %s46
    %s48 = sphi 0, %s46
    %s49 = sphi 0, %s48
    %s63 = sphi 0, %s49
    %s67 = sphi 0, %s67
    %s69 = sphi 0, %s67
    %s70 = sphi 0, %s69
    %s84 = sphi 0, %s70
    %s88 = sphi 0, %s88
    %s90 = sphi 0, %s88
    %s91 = sphi 0, %s90
    %s105 = sphi 0, %s91
    %s109 = sphi 0, %s109
    %s111 = sphi 0, %s109
    %s112 = sphi 0, %s111
    %s126 = sphi 0, %s112
    %s130 = sphi 0, %s130
    %s132 = sphi 0, %s130
    %s133 = sphi 0, %s132
    %s147 = sphi 0, %s133
    %s153 = sphi 0, %s155
    %s156 = sphi 0, %s153
    %s157 = sphi 0, %s156
    %s173 = sphi 0, %s157
  $region4: #{threec_forward.1} parent=0 // loop_header_branch
    %15 = sbr.rel (%p13) target = $region8
  $region5: #{threec_forward.1} parent=0 // loop_body
    %s17 = ssub.s32 %s12, 1
    %s18 = ssub.s32 %s12, 2
    %s19 = sadd.s32 %s12, 1
    %s20 = ssub.s32 %s12, %s19
    %p21 = scmp.eq.s32.totalorder %s20, 0
    %s23 = sadd.s32 %s22, 1
    %s24 = scalar_select %p21, %s22, %s23
    %p27 = pneg %p21
    %p28 = scmp.eq.s32.totalorder %s12, 1
    %p29 = por %p27, %p28
    %p30 = scmp.ne.s32.totalorder %s22, %s25
    %p31 = scmp.eq.s32.totalorder %s12, 0
    %p32 = por %p30, %p31
    %p33 = scmp.ne.s32.totalorder %s22, %s25
    %p34 = scmp.eq.s32.totalorder %s17, 1
    %p35 = por %p33, %p34
    %p36 = scmp.ne.s32.totalorder %s25, %s26
    %p37 = scmp.eq.s32.totalorder %s17, 0
    %p38 = por %p36, %p37
    %p39 = scmp.ne.s32.totalorder %s25, %s26
    %p40 = scmp.eq.s32.totalorder %s18, 1
    %p41 = por %p39, %p40
    %p43 = scmp.ne.s32.totalorder %s26, %s42
    %p44 = scmp.eq.s32.totalorder %s18, 0
    %p45 = por %p43, %p44
    %s47 = sadd.s32 %s46, 1
    %p50 = scmp.eq.s32.totalorder %s12, 1
    %p51 = scmp.ne.s32.totalorder %s46, %s48
    %p52 = scmp.eq.s32.totalorder %s12, 0
    %p53 = por %p51, %p52
    %p54 = scmp.ne.s32.totalorder %s46, %s48
    %p55 = scmp.eq.s32.totalorder %s17, 1
    %p56 = por %p54, %p55
    %p57 = scmp.ne.s32.totalorder %s48, %s49
    %p58 = scmp.eq.s32.totalorder %s17, 0
    %p59 = por %p57, %p58
    %p60 = scmp.ne.s32.totalorder %s48, %s49
    %p61 = scmp.eq.s32.totalorder %s18, 1
    %p62 = por %p60, %p61
    %p64 = scmp.ne.s32.totalorder %s49, %s63
    %p65 = scmp.eq.s32.totalorder %s18, 0
    %p66 = por %p64, %p65
    %s68 = sadd.s32 %s67, 1
    %p71 = scmp.eq.s32.totalorder %s12, 1
    %p72 = scmp.ne.s32.totalorder %s67, %s69
    %p73 = scmp.eq.s32.totalorder %s12, 0
    %p74 = por %p72, %p73
    %p75 = scmp.ne.s32.totalorder %s67, %s69
    %p76 = scmp.eq.s32.totalorder %s17, 1
    %p77 = por %p75, %p76
    %p78 = scmp.ne.s32.totalorder %s69, %s70
    %p79 = scmp.eq.s32.totalorder %s17, 0
    %p80 = por %p78, %p79
    %p81 = scmp.ne.s32.totalorder %s69, %s70
    %p82 = scmp.eq.s32.totalorder %s18, 1
    %p83 = por %p81, %p82
    %p85 = scmp.ne.s32.totalorder %s70, %s84
    %p86 = scmp.eq.s32.totalorder %s18, 0
    %p87 = por %p85, %p86
    %s89 = sadd.s32 %s88, 1
    %p92 = scmp.eq.s32.totalorder %s12, 1
    %p93 = scmp.ne.s32.totalorder %s88, %s90
    %p94 = scmp.eq.s32.totalorder %s12, 0
    %p95 = por %p93, %p94
    %p96 = scmp.ne.s32.totalorder %s88, %s90
    %p97 = scmp.eq.s32.totalorder %s17, 1
    %p98 = por %p96, %p97
    %p99 = scmp.ne.s32.totalorder %s90, %s91
    %p100 = scmp.eq.s32.totalorder %s17, 0
    %p101 = por %p99, %p100
    %p102 = scmp.ne.s32.totalorder %s90, %s91
    %p103 = scmp.eq.s32.totalorder %s18, 1
    %p104 = por %p102, %p103
    %p106 = scmp.ne.s32.totalorder %s91, %s105
    %p107 = scmp.eq.s32.totalorder %s18, 0
    %p108 = por %p106, %p107
    %s110 = sadd.s32 %s109, 1
    %p113 = scmp.eq.s32.totalorder %s12, 1
    %p114 = scmp.ne.s32.totalorder %s109, %s111
    %p115 = scmp.eq.s32.totalorder %s12, 0
    %p116 = por %p114, %p115
    %p117 = scmp.ne.s32.totalorder %s109, %s111
    %p118 = scmp.eq.s32.totalorder %s17, 1
    %p119 = por %p117, %p118
    %p120 = scmp.ne.s32.totalorder %s111, %s112
    %p121 = scmp.eq.s32.totalorder %s17, 0
    %p122 = por %p120, %p121
    %p123 = scmp.ne.s32.totalorder %s111, %s112
    %p124 = scmp.eq.s32.totalorder %s18, 1
    %p125 = por %p123, %p124
    %p127 = scmp.ne.s32.totalorder %s112, %s126
    %p128 = scmp.eq.s32.totalorder %s18, 0
    %p129 = por %p127, %p128
    %s131 = sadd.s32 %s130, 1
    %p134 = scmp.eq.s32.totalorder %s12, 1
    %p135 = scmp.ne.s32.totalorder %s130, %s132
    %p136 = scmp.eq.s32.totalorder %s12, 0
    %p137 = por %p135, %p136
    %p138 = scmp.ne.s32.totalorder %s130, %s132
    %p139 = scmp.eq.s32.totalorder %s17, 1
    %p140 = por %p138, %p139
    %p141 = scmp.ne.s32.totalorder %s132, %s133
    %p142 = scmp.eq.s32.totalorder %s17, 0
    %p143 = por %p141, %p142
    %p144 = scmp.ne.s32.totalorder %s132, %s133
    %p145 = scmp.eq.s32.totalorder %s18, 1
    %p146 = por %p144, %p145
    %p148 = scmp.ne.s32.totalorder %s133, %s147
    %p149 = scmp.eq.s32.totalorder %s18, 0
    %p150 = por %p148, %p149
    %s151 = ssub.s32 %s12, %s19
    %p152 = scmp.eq.s32.totalorder %s151, 0
    %s154 = sadd.s32 %s153, 1
    %s155 = scalar_select %p152, %s153, %s154
    %p158 = pneg %p152
    %p159 = scmp.eq.s32.totalorder %s12, 1
    %p160 = por %p158, %p159
    %p161 = scmp.ne.s32.totalorder %s153, %s156
    %p162 = scmp.eq.s32.totalorder %s12, 0
    %p163 = por %p161, %p162
    %p164 = scmp.ne.s32.totalorder %s153, %s156
    %p165 = scmp.eq.s32.totalorder %s17, 1
    %p166 = por %p164, %p165
    %p167 = scmp.ne.s32.totalorder %s156, %s157
    %p168 = scmp.eq.s32.totalorder %s17, 0
    %p169 = por %p167, %p168
    %p170 = scmp.ne.s32.totalorder %s156, %s157
    %p171 = scmp.eq.s32.totalorder %s18, 1
    %p172 = por %p170, %p171
    %p174 = scmp.ne.s32.totalorder %s157, %s173
    %p175 = scmp.eq.s32.totalorder %s18, 0
    %p176 = por %p174, %p175
    %p177 = scmp.le.s32.totalorder 1, %s12
    %p178 = scmp.lt.s32.totalorder %s12, 3
    %p179 = pnand %p177, %p178
    %p180 = pneg %p179
    // Predicated region
    $region9: #{threec_forward.1} parent=5 // pred_check
      _
    $region10: #{threec_forward.1} parent=5 // pred_check_branch
      %182 = sbr.rel (%p179) target = $region12
    $region11: #{threec_forward.1} parent=5 // pred_region
      %s183 = ssub.s32 %s12, 1
      // Predicated region
      $region13: #{threec_forward.1} parent=11 // pred_check
        %p184 = pneg %p59
      $region14: #{threec_forward.1} parent=11 // pred_check_branch
        %186 = sbr.rel (%p184) target = $region16
      $region15: #{threec_forward.1} parent=11 // pred_region
        _
      $region16: #{threec_forward.1} parent=11 // pred_fallthru
        _
      // Predicated region
      $region17: #{threec_forward.1} parent=11 // pred_check
        %p187 = pneg %p80
      $region18: #{threec_forward.1} parent=11 // pred_check_branch
        %189 = sbr.rel (%p187) target = $region20
      $region19: #{threec_forward.1} parent=11 // pred_region
        _
      $region20: #{threec_forward.1} parent=11 // pred_fallthru
        _
      // Predicated region
      $region21: #{threec_forward.1} parent=11 // pred_check
        %p190 = pneg %p101
      $region22: #{threec_forward.1} parent=11 // pred_check_branch
        %192 = sbr.rel (%p190) target = $region24
      $region23: #{threec_forward.1} parent=11 // pred_region
        _
      $region24: #{threec_forward.1} parent=11 // pred_fallthru
        _
      // Predicated region
      $region25: #{threec_forward.1} parent=11 // pred_check
        %p193 = pneg %p122
      $region26: #{threec_forward.1} parent=11 // pred_check_branch
        %195 = sbr.rel (%p193) target = $region28
      $region27: #{threec_forward.1} parent=11 // pred_region
        _
      $region28: #{threec_forward.1} parent=11 // pred_fallthru
        _
      // Predicated region
      $region29: #{threec_forward.1} parent=11 // pred_check
        %p196 = pneg %p143
      $region30: #{threec_forward.1} parent=11 // pred_check_branch
        %198 = sbr.rel (%p196) target = $region32
      $region31: #{threec_forward.1} parent=11 // pred_region
        _
      $region32: #{threec_forward.1} parent=11 // pred_fallthru
        _
    $region12: #{threec_forward.1} parent=5 // pred_fallthru
      _
    %p199 = scmp.lt.s32.totalorder %s12, 2
    // Predicated region
    $region33: #{threec_forward.1} parent=5 // pred_check
      %p200 = pneg %p199
    $region34: #{threec_forward.1} parent=5 // pred_check_branch
      %202 = sbr.rel (%p200) target = $region36
    $region35: #{threec_forward.1} parent=5 // pred_region
      // Predicated region
      $region37: #{threec_forward.1} parent=35 // pred_check
        %p203 = pneg %p32
      $region38: #{threec_forward.1} parent=35 // pred_check_branch
        %205 = sbr.rel (%p203) target = $region40
      $region39: #{threec_forward.1} parent=35 // pred_region
        %p206 = scmp.lt.s32.totalorder %s12, 1
        %s207 = scalar_select %p206, %s12, 1
        %s208 = smul.addr %s207, 4
        %s209 = smul.addr %s208, 8
        %s210 = scalar_lea.vmem %s0, %s209
      $region40: #{threec_forward.1} parent=35 // pred_fallthru
        _
    $region36: #{threec_forward.1} parent=5 // pred_fallthru
      _
    %p211 = scmp.le.s32.totalorder 1, %s12
    %p212 = scmp.lt.s32.totalorder %s12, 3
    %p213 = pnand %p211, %p212
    %p214 = pneg %p213
    // Predicated region
    $region41: #{threec_forward.1} parent=5 // pred_check
      _
    $region42: #{threec_forward.1} parent=5 // pred_check_branch
      %216 = sbr.rel (%p213) target = $region44
    $region43: #{threec_forward.1} parent=5 // pred_region
      %s217 = ssub.s32 %s12, 1
      %p218 = scmp.lt.s32.totalorder %s17, 1
      %s219 = scalar_select %p218, %s17, 1
      %s220 = smul.addr %s219, 4
      %s221 = smul.addr %s220, 8
      %s222 = scalar_lea.vmem %s0, %s221
      %p223 = pneg %p38
      %p224 = pneg %p35
      %p225 = pneg %p59
      %p226 = pneg %p56
      %p227 = pneg %p80
      %p228 = pneg %p77
      %p229 = pneg %p101
      %p230 = pneg %p98
      %p231 = pneg %p122
      %p232 = pneg %p119
      %p233 = pneg %p143
      %p234 = pneg %p140
      %p235 = pneg %p169
      %p236 = pneg %p166
      %p237 = scmp.lt.s32.totalorder %s17, 1
      %s238 = scalar_select %p237, %s17, 1
      %s239 = smul.addr %s238, 2
      %s240 = smul.addr %s239, 8
      %s241 = scalar_lea.vmem %s6, %s240
      %p242 = scmp.lt.s32.totalorder %s17, 1
      %s243 = scalar_select %p242, %s17, 1
      %s244 = smul.addr %s243, 4
      %s245 = smul.addr %s244, 8
      %s246 = scalar_lea.vmem %s0, %s245
      %p247 = scmp.lt.s32.totalorder %s17, 1
      %s248 = scalar_select %p247, %s17, 1
      %s249 = smul.addr %s248, 2
      %s250 = smul.addr %s249, 8
      %s251 = scalar_lea.vmem %s6, %s250
      %v252 = vld [vmem:[%s246] sm:$0xff]
      %v253 = vld [vmem:[%s246 + $0x8] sm:$0xff]
      %v254 = vld [vmem:[%s246 + $0x10] sm:$0xff]
      %v255 = vld [vmem:[%s246 + $0x18] sm:$0xff]
      %v256 = vld [vmem:[%s5] sm:$0xff]
      %v257 = vld [vmem:[%s5 + $0x8] sm:$0xff]
      %v258 = vld [vmem:[%s5 + $0x10] sm:$0x1]
      %v259 = vld [vmem:[%s5 + $0x18] sm:$0x1]
      %260 = vrot.lane.b32.xlu0 %v252, 17
      %v261 = vpop.permute.xlu0 %260
      %262 = vrot.lane.b32.xlu0 %v254, 17
      %v263 = vpop.permute.xlu0 %262
      %264 = vrot.lane.b32.xlu0 %v253, 17
      %v265 = vpop.permute.xlu0 %264
      %266 = vrot.lane.b32.xlu0 %v255, 17
      %v267 = vpop.permute.xlu0 %266
      %v268 = vlaneseq
      %v269 = vand.u32 %v268, 127
      %vm270 = vcmp.lt.s32.totalorder %v269, 17
      %v271 = vsel %vm270, %v261, %v265
      %v272 = vsel %vm270, %v263, %v267
      %v273 = vsel %vm270, %v265, %v261
      %v274 = vsel %vm270, %v267, %v263
      %v275 = vld [vmem:[%s1] sm:$0xff]
      %v276 = vld [vmem:[%s1 + $0x8] sm:$0xff]
      %vm277 = vcmask 130048
      %v279 = vsel %vm277, %v275, 0
      %v282 = vsel %vm277, %v276, 0
      %284 = vmatpush.msra.mxu0 0.0
      %285 = vmatpush.msra.mxu0 0.0
      %286 = vmatpush.msra.mxu0 0.0
      %287 = vmatpush.msra.mxu0 0.0
      %288 = vmatpush.msra.mxu0 0.0
      %289 = vmatpush.msra.mxu0 0.0
      %290 = vmatpush.msra.mxu0 0.0
      %291 = vmatpush.msra.mxu0 0.0
      %292 = vmatpush.msra.mxu0 0.0
      %293 = vmatpush.msra.mxu0 0.0
      %294 = vmatpush.msra.mxu0 0.0
      %295 = vmatpush.msra.mxu0 0.0
      %296 = vmatpush.msra.mxu0 0.0
      %297 = vmatpush.msra.mxu0 0.0
      %298 = vmatpush.msra.mxu0 %v274
      %299 = vmatpush.msra.mxu0 %v273
      %300 = vmatmul.f32.gmra.mxu0 %v279
      %v301 = vpop.f32.mrf.mxu0
      %v302 = vadd.f32 0.0, %v301
      %303 = vmatmul.f32.gmra.mxu0 %v282
      %v304 = vpop.f32.mrf.mxu0
      %v305 = vadd.f32 0.0, %v304
      %306 = vdwg.mxu0
      %307 = vmatpush.msra.mxu0 0.0
      %308 = vmatpush.msra.mxu0 0.0
      %309 = vmatpush.msra.mxu0 0.0
      %310 = vmatpush.msra.mxu0 0.0
      %311 = vmatpush.msra.mxu0 0.0
      %312 = vmatpush.msra.mxu0 0.0
      %313 = vmatpush.msra.mxu0 0.0
      %314 = vmatpush.msra.mxu0 0.0
      %315 = vmatpush.msra.mxu0 0.0
      %316 = vmatpush.msra.mxu0 0.0
      %317 = vmatpush.msra.mxu0 0.0
      %318 = vmatpush.msra.mxu0 0.0
      %319 = vmatpush.msra.mxu0 0.0
      %320 = vmatpush.msra.mxu0 0.0
      %321 = vmatpush.msra.mxu0 %v272
      %322 = vmatpush.msra.mxu0 %v271
      %323 = vmatmul.f32.gmra.mxu0 %v279
      %v324 = vpop.f32.mrf.mxu0
      %v325 = vadd.f32 0.0, %v324
      %326 = vmatmul.f32.gmra.mxu0 %v282
      %v327 = vpop.f32.mrf.mxu0
      %v328 = vadd.f32 0.0, %v327
      %329 = vdwg.mxu0
      %v330 = vperm.slane %v256, 0
      %v331 = vperm.slane %v257, 0
      %v332 = vmul.f32 %v302, %v330
      %v333 = vmul.f32 %v325, %v331
      %v334 = vmul.f32 %v305, %v330
      %v335 = vmul.f32 %v328, %v331
      %v336 = vadd.f32 %v332, 0.0
      %v337 = vadd.f32 %v333, 0.0
      %v338 = vadd.f32 %v334, 0.0
      %v339 = vadd.f32 %v335, 0.0
      %340 = vrot.lane.b32.xlu0 %v252, 16
      %v341 = vpop.permute.xlu0 %340
      %342 = vrot.lane.b32.xlu0 %v254, 16
      %v343 = vpop.permute.xlu0 %342
      %344 = vrot.lane.b32.xlu0 %v253, 16
      %v345 = vpop.permute.xlu0 %344
      %346 = vrot.lane.b32.xlu0 %v255, 16
      %v347 = vpop.permute.xlu0 %346
      %vm348 = vcmp.lt.s32.totalorder %v269, 16
      %v349 = vsel %vm348, %v341, %v345
      %v350 = vsel %vm348, %v343, %v347
      %v351 = vsel %vm348, %v345, %v341
      %v352 = vsel %vm348, %v347, %v343
      %s353 = scalar_lea.vmem %s1, 16
      %v354 = vld [vmem:[%s353] sm:$0xff]
      %v355 = vld [vmem:[%s353 + $0x8] sm:$0xff]
      %v357 = vsel %vm277, %v354, 0
      %v360 = vsel %vm277, %v355, 0
      %362 = vmatpush.msra.mxu0 0.0
      %363 = vmatpush.msra.mxu0 0.0
      %364 = vmatpush.msra.mxu0 0.0
      %365 = vmatpush.msra.mxu0 0.0
      %366 = vmatpush.msra.mxu0 0.0
      %367 = vmatpush.msra.mxu0 0.0
      %368 = vmatpush.msra.mxu0 0.0
      %369 = vmatpush.msra.mxu0 0.0
      %370 = vmatpush.msra.mxu0 0.0
      %371 = vmatpush.msra.mxu0 0.0
      %372 = vmatpush.msra.mxu0 0.0
      %373 = vmatpush.msra.mxu0 0.0
      %374 = vmatpush.msra.mxu0 0.0
      %375 = vmatpush.msra.mxu0 0.0
      %376 = vmatpush.msra.mxu0 %v352
      %377 = vmatpush.msra.mxu0 %v351
      %378 = vmatmul.f32.gmra.mxu0 %v357
      %v379 = vpop.f32.mrf.mxu0
      %v380 = vadd.f32 0.0, %v379
      %381 = vmatmul.f32.gmra.mxu0 %v360
      %v382 = vpop.f32.mrf.mxu0
      %v383 = vadd.f32 0.0, %v382
      %384 = vdwg.mxu0
      %385 = vmatpush.msra.mxu0 0.0
      %386 = vmatpush.msra.mxu0 0.0
      %387 = vmatpush.msra.mxu0 0.0
      %388 = vmatpush.msra.mxu0 0.0
      %389 = vmatpush.msra.mxu0 0.0
      %390 = vmatpush.msra.mxu0 0.0
      %391 = vmatpush.msra.mxu0 0.0
      %392 = vmatpush.msra.mxu0 0.0
      %393 = vmatpush.msra.mxu0 0.0
      %394 = vmatpush.msra.mxu0 0.0
      %395 = vmatpush.msra.mxu0 0.0
      %396 = vmatpush.msra.mxu0 0.0
      %397 = vmatpush.msra.mxu0 0.0
      %398 = vmatpush.msra.mxu0 0.0
      %399 = vmatpush.msra.mxu0 %v350
      %400 = vmatpush.msra.mxu0 %v349
      %401 = vmatmul.f32.gmra.mxu0 %v357
      %v402 = vpop.f32.mrf.mxu0
      %v403 = vadd.f32 0.0, %v402
      %404 = vmatmul.f32.gmra.mxu0 %v360
      %v405 = vpop.f32.mrf.mxu0
      %v406 = vadd.f32 0.0, %v405
      %407 = vdwg.mxu0
      %v408 = vperm.slane %v256, 1
      %v409 = vperm.slane %v257, 1
      %v410 = vmul.f32 %v380, %v408
      %v411 = vmul.f32 %v403, %v409
      %v412 = vmul.f32 %v383, %v408
      %v413 = vmul.f32 %v406, %v409
      %v414 = vadd.f32 %v336, %v410
      %v415 = vadd.f32 %v337, %v411
      %v416 = vadd.f32 %v338, %v412
      %v417 = vadd.f32 %v339, %v413
      %418 = vrot.lane.b32.xlu0 %v252, 15
      %v419 = vpop.permute.xlu0 %418
      %420 = vrot.lane.b32.xlu0 %v254, 15
      %v421 = vpop.permute.xlu0 %420
      %422 = vrot.lane.b32.xlu0 %v253, 15
      %v423 = vpop.permute.xlu0 %422
      %424 = vrot.lane.b32.xlu0 %v255, 15
      %v425 = vpop.permute.xlu0 %424
      %vm426 = vcmp.lt.s32.totalorder %v269, 15
      %v427 = vsel %vm426, %v419, %v423
      %v428 = vsel %vm426, %v421, %v425
      %v429 = vsel %vm426, %v423, %v419
      %v430 = vsel %vm426, %v425, %v421
      %s431 = scalar_lea.vmem %s1, 32
      %v432 = vld [vmem:[%s431] sm:$0xff]
      %v433 = vld [vmem:[%s431 + $0x8] sm:$0xff]
      %v435 = vsel %vm277, %v432, 0
      %v438 = vsel %vm277, %v433, 0
      %440 = vmatpush.msra.mxu0 0.0
      %441 = vmatpush.msra.mxu0 0.0
      %442 = vmatpush.msra.mxu0 0.0
      %443 = vmatpush.msra.mxu0 0.0
      %444 = vmatpush.msra.mxu0 0.0
      %445 = vmatpush.msra.mxu0 0.0
      %446 = vmatpush.msra.mxu0 0.0
      %447 = vmatpush.msra.mxu0 0.0
      %448 = vmatpush.msra.mxu0 0.0
      %449 = vmatpush.msra.mxu0 0.0
      %450 = vmatpush.msra.mxu0 0.0
      %451 = vmatpush.msra.mxu0 0.0
      %452 = vmatpush.msra.mxu0 0.0
      %453 = vmatpush.msra.mxu0 0.0
      %454 = vmatpush.msra.mxu0 %v430
      %455 = vmatpush.msra.mxu0 %v429
      %456 = vmatmul.f32.gmra.mxu0 %v435
      %v457 = vpop.f32.mrf.mxu0
      %v458 = vadd.f32 0.0, %v457
      %459 = vmatmul.f32.gmra.mxu0 %v438
      %v460 = vpop.f32.mrf.mxu0
      %v461 = vadd.f32 0.0, %v460
      %462 = vdwg.mxu0
      %463 = vmatpush.msra.mxu0 0.0
      %464 = vmatpush.msra.mxu0 0.0
      %465 = vmatpush.msra.mxu0 0.0
      %466 = vmatpush.msra.mxu0 0.0
      %467 = vmatpush.msra.mxu0 0.0
      %468 = vmatpush.msra.mxu0 0.0
      %469 = vmatpush.msra.mxu0 0.0
      %470 = vmatpush.msra.mxu0 0.0
      %471 = vmatpush.msra.mxu0 0.0
      %472 = vmatpush.msra.mxu0 0.0
      %473 = vmatpush.msra.mxu0 0.0
      %474 = vmatpush.msra.mxu0 0.0
      %475 = vmatpush.msra.mxu0 0.0
      %476 = vmatpush.msra.mxu0 0.0
      %477 = vmatpush.msra.mxu0 %v428
      %478 = vmatpush.msra.mxu0 %v427
      %479 = vmatmul.f32.gmra.mxu0 %v435
      %v480 = vpop.f32.mrf.mxu0
      %v481 = vadd.f32 0.0, %v480
      %482 = vmatmul.f32.gmra.mxu0 %v438
      %v483 = vpop.f32.mrf.mxu0
      %v484 = vadd.f32 0.0, %v483
      %485 = vdwg.mxu0
      %v486 = vperm.slane %v256, 2
      %v487 = vperm.slane %v257, 2
      %v488 = vmul.f32 %v458, %v486
      %v489 = vmul.f32 %v481, %v487
      %v490 = vmul.f32 %v461, %v486
      %v491 = vmul.f32 %v484, %v487
      %v492 = vadd.f32 %v414, %v488
      %v493 = vadd.f32 %v415, %v489
      %v494 = vadd.f32 %v416, %v490
      %v495 = vadd.f32 %v417, %v491
      %496 = vrot.lane.b32.xlu0 %v252, 1
      %v497 = vpop.permute.xlu0 %496
      %498 = vrot.lane.b32.xlu0 %v254, 1
      %v499 = vpop.permute.xlu0 %498
      %500 = vrot.lane.b32.xlu0 %v253, 1
      %v501 = vpop.permute.xlu0 %500
      %502 = vrot.lane.b32.xlu0 %v255, 1
      %v503 = vpop.permute.xlu0 %502
      %vm504 = vcmp.lt.s32.totalorder %v269, 1
      %v505 = vsel %vm504, %v497, %v501
      %v506 = vsel %vm504, %v499, %v503
      %v507 = vsel %vm504, %v501, %v497
      %v508 = vsel %vm504, %v503, %v499
      %s509 = scalar_lea.vmem %s1, 48
      %v510 = vld [vmem:[%s509] sm:$0xff]
      %v511 = vld [vmem:[%s509 + $0x8] sm:$0xff]
      %v513 = vsel %vm277, %v510, 0
      %v516 = vsel %vm277, %v511, 0
      %518 = vmatpush.msra.mxu0 0.0
      %519 = vmatpush.msra.mxu0 0.0
      %520 = vmatpush.msra.mxu0 0.0
      %521 = vmatpush.msra.mxu0 0.0
      %522 = vmatpush.msra.mxu0 0.0
      %523 = vmatpush.msra.mxu0 0.0
      %524 = vmatpush.msra.mxu0 0.0
      %525 = vmatpush.msra.mxu0 0.0
      %526 = vmatpush.msra.mxu0 0.0
      %527 = vmatpush.msra.mxu0 0.0
      %528 = vmatpush.msra.mxu0 0.0
      %529 = vmatpush.msra.mxu0 0.0
      %530 = vmatpush.msra.mxu0 0.0
      %531 = vmatpush.msra.mxu0 0.0
      %532 = vmatpush.msra.mxu0 %v508
      %533 = vmatpush.msra.mxu0 %v507
      %534 = vmatmul.f32.gmra.mxu0 %v513
      %v535 = vpop.f32.mrf.mxu0
      %v536 = vadd.f32 0.0, %v535
      %537 = vmatmul.f32.gmra.mxu0 %v516
      %v538 = vpop.f32.mrf.mxu0
      %v539 = vadd.f32 0.0, %v538
      %540 = vdwg.mxu0
      %541 = vmatpush.msra.mxu0 0.0
      %542 = vmatpush.msra.mxu0 0.0
      %543 = vmatpush.msra.mxu0 0.0
      %544 = vmatpush.msra.mxu0 0.0
      %545 = vmatpush.msra.mxu0 0.0
      %546 = vmatpush.msra.mxu0 0.0
      %547 = vmatpush.msra.mxu0 0.0
      %548 = vmatpush.msra.mxu0 0.0
      %549 = vmatpush.msra.mxu0 0.0
      %550 = vmatpush.msra.mxu0 0.0
      %551 = vmatpush.msra.mxu0 0.0
      %552 = vmatpush.msra.mxu0 0.0
      %553 = vmatpush.msra.mxu0 0.0
      %554 = vmatpush.msra.mxu0 0.0
      %555 = vmatpush.msra.mxu0 %v506
      %556 = vmatpush.msra.mxu0 %v505
      %557 = vmatmul.f32.gmra.mxu0 %v513
      %v558 = vpop.f32.mrf.mxu0
      %v559 = vadd.f32 0.0, %v558
      %560 = vmatmul.f32.gmra.mxu0 %v516
      %v561 = vpop.f32.mrf.mxu0
      %v562 = vadd.f32 0.0, %v561
      %563 = vdwg.mxu0
      %v564 = vperm.slane %v256, 3
      %v565 = vperm.slane %v257, 3
      %v566 = vmul.f32 %v536, %v564
      %v567 = vmul.f32 %v559, %v565
      %v568 = vmul.f32 %v539, %v564
      %v569 = vmul.f32 %v562, %v565
      %v570 = vadd.f32 %v492, %v566
      %v571 = vadd.f32 %v493, %v567
      %v572 = vadd.f32 %v494, %v568
      %v573 = vadd.f32 %v495, %v569
      %s574 = scalar_lea.vmem %s1, 64
      %v575 = vld [vmem:[%s574] sm:$0xff]
      %v576 = vld [vmem:[%s574 + $0x8] sm:$0xff]
      %v578 = vsel %vm277, %v575, 0
      %v581 = vsel %vm277, %v576, 0
      %583 = vmatpush.msra.mxu0 0.0
      %584 = vmatpush.msra.mxu0 0.0
      %585 = vmatpush.msra.mxu0 0.0
      %586 = vmatpush.msra.mxu0 0.0
      %587 = vmatpush.msra.mxu0 0.0
      %588 = vmatpush.msra.mxu0 0.0
      %589 = vmatpush.msra.mxu0 0.0
      %590 = vmatpush.msra.mxu0 0.0
      %591 = vmatpush.msra.mxu0 0.0
      %592 = vmatpush.msra.mxu0 0.0
      %593 = vmatpush.msra.mxu0 0.0
      %594 = vmatpush.msra.mxu0 0.0
      %595 = vmatpush.msra.mxu0 0.0
      %596 = vmatpush.msra.mxu0 0.0
      %597 = vmatpush.msra.mxu0 %v254
      %598 = vmatpush.msra.mxu0 %v252
      %599 = vmatmul.f32.gmra.mxu0 %v578
      %v600 = vpop.f32.mrf.mxu0
      %v601 = vadd.f32 0.0, %v600
      %602 = vmatmul.f32.gmra.mxu0 %v581
      %v603 = vpop.f32.mrf.mxu0
      %v604 = vadd.f32 0.0, %v603
      %605 = vdwg.mxu0
      %606 = vmatpush.msra.mxu0 0.0
      %607 = vmatpush.msra.mxu0 0.0
      %608 = vmatpush.msra.mxu0 0.0
      %609 = vmatpush.msra.mxu0 0.0
      %610 = vmatpush.msra.mxu0 0.0
      %611 = vmatpush.msra.mxu0 0.0
      %612 = vmatpush.msra.mxu0 0.0
      %613 = vmatpush.msra.mxu0 0.0
      %614 = vmatpush.msra.mxu0 0.0
      %615 = vmatpush.msra.mxu0 0.0
      %616 = vmatpush.msra.mxu0 0.0
      %617 = vmatpush.msra.mxu0 0.0
      %618 = vmatpush.msra.mxu0 0.0
      %619 = vmatpush.msra.mxu0 0.0
      %620 = vmatpush.msra.mxu0 %v255
      %621 = vmatpush.msra.mxu0 %v253
      %622 = vmatmul.f32.gmra.mxu0 %v578
      %v623 = vpop.f32.mrf.mxu0
      %v624 = vadd.f32 0.0, %v623
      %625 = vmatmul.f32.gmra.mxu0 %v581
      %v626 = vpop.f32.mrf.mxu0
      %v627 = vadd.f32 0.0, %v626
      %628 = vdwg.mxu0
      %v629 = vadd.f32 %v570, %v601
      %v630 = vadd.f32 %v571, %v624
      %v631 = vadd.f32 %v572, %v604
      %v632 = vadd.f32 %v573, %v627
      %633 = vrot.lane.b32.xlu0 %v252, 127
      %v634 = vpop.permute.xlu0 %633
      %635 = vrot.lane.b32.xlu0 %v254, 127
      %v636 = vpop.permute.xlu0 %635
      %637 = vrot.lane.b32.xlu0 %v253, 127
      %v638 = vpop.permute.xlu0 %637
      %639 = vrot.lane.b32.xlu0 %v255, 127
      %v640 = vpop.permute.xlu0 %639
      %vm641 = vcmp.lt.s32.totalorder %v269, 127
      %v642 = vsel %vm641, %v634, %v638
      %v643 = vsel %vm641, %v636, %v640
      %v644 = vsel %vm641, %v638, %v634
      %v645 = vsel %vm641, %v640, %v636
      %s646 = scalar_lea.vmem %s1, 80
      %v647 = vld [vmem:[%s646] sm:$0xff]
      %v648 = vld [vmem:[%s646 + $0x8] sm:$0xff]
      %v650 = vsel %vm277, %v647, 0
      %v653 = vsel %vm277, %v648, 0
      %655 = vmatpush.msra.mxu0 0.0
      %656 = vmatpush.msra.mxu0 0.0
      %657 = vmatpush.msra.mxu0 0.0
      %658 = vmatpush.msra.mxu0 0.0
      %659 = vmatpush.msra.mxu0 0.0
      %660 = vmatpush.msra.mxu0 0.0
      %661 = vmatpush.msra.mxu0 0.0
      %662 = vmatpush.msra.mxu0 0.0
      %663 = vmatpush.msra.mxu0 0.0
      %664 = vmatpush.msra.mxu0 0.0
      %665 = vmatpush.msra.mxu0 0.0
      %666 = vmatpush.msra.mxu0 0.0
      %667 = vmatpush.msra.mxu0 0.0
      %668 = vmatpush.msra.mxu0 0.0
      %669 = vmatpush.msra.mxu0 %v643
      %670 = vmatpush.msra.mxu0 %v642
      %671 = vmatmul.f32.gmra.mxu0 %v650
      %v672 = vpop.f32.mrf.mxu0
      %v673 = vadd.f32 0.0, %v672
      %674 = vmatmul.f32.gmra.mxu0 %v653
      %v675 = vpop.f32.mrf.mxu0
      %v676 = vadd.f32 0.0, %v675
      %677 = vdwg.mxu0
      %678 = vmatpush.msra.mxu0 0.0
      %679 = vmatpush.msra.mxu0 0.0
      %680 = vmatpush.msra.mxu0 0.0
      %681 = vmatpush.msra.mxu0 0.0
      %682 = vmatpush.msra.mxu0 0.0
      %683 = vmatpush.msra.mxu0 0.0
      %684 = vmatpush.msra.mxu0 0.0
      %685 = vmatpush.msra.mxu0 0.0
      %686 = vmatpush.msra.mxu0 0.0
      %687 = vmatpush.msra.mxu0 0.0
      %688 = vmatpush.msra.mxu0 0.0
      %689 = vmatpush.msra.mxu0 0.0
      %690 = vmatpush.msra.mxu0 0.0
      %691 = vmatpush.msra.mxu0 0.0
      %692 = vmatpush.msra.mxu0 %v645
      %693 = vmatpush.msra.mxu0 %v644
      %694 = vmatmul.f32.gmra.mxu0 %v650
      %v695 = vpop.f32.mrf.mxu0
      %v696 = vadd.f32 0.0, %v695
      %697 = vmatmul.f32.gmra.mxu0 %v653
      %v698 = vpop.f32.mrf.mxu0
      %v699 = vadd.f32 0.0, %v698
      %700 = vdwg.mxu0
      %v701 = vperm.slane %v256, 5
      %v702 = vperm.slane %v257, 5
      %v703 = vmul.f32 %v673, %v701
      %v704 = vmul.f32 %v696, %v702
      %v705 = vmul.f32 %v676, %v701
      %v706 = vmul.f32 %v699, %v702
      %v707 = vadd.f32 %v629, %v703
      %v708 = vadd.f32 %v630, %v704
      %v709 = vadd.f32 %v631, %v705
      %v710 = vadd.f32 %v632, %v706
      %711 = vrot.lane.b32.xlu0 %v252, 113
      %v712 = vpop.permute.xlu0 %711
      %713 = vrot.lane.b32.xlu0 %v254, 113
      %v714 = vpop.permute.xlu0 %713
      %715 = vrot.lane.b32.xlu0 %v253, 113
      %v716 = vpop.permute.xlu0 %715
      %717 = vrot.lane.b32.xlu0 %v255, 113
      %v718 = vpop.permute.xlu0 %717
      %vm719 = vcmp.lt.s32.totalorder %v269, 113
      %v720 = vsel %vm719, %v712, %v716
      %v721 = vsel %vm719, %v714, %v718
      %v722 = vsel %vm719, %v716, %v712
      %v723 = vsel %vm719, %v718, %v714
      %s724 = scalar_lea.vmem %s1, 96
      %v725 = vld [vmem:[%s724] sm:$0xff]
      %v726 = vld [vmem:[%s724 + $0x8] sm:$0xff]
      %v728 = vsel %vm277, %v725, 0
      %v731 = vsel %vm277, %v726, 0
      %733 = vmatpush.msra.mxu0 0.0
      %734 = vmatpush.msra.mxu0 0.0
      %735 = vmatpush.msra.mxu0 0.0
      %736 = vmatpush.msra.mxu0 0.0
      %737 = vmatpush.msra.mxu0 0.0
      %738 = vmatpush.msra.mxu0 0.0
      %739 = vmatpush.msra.mxu0 0.0
      %740 = vmatpush.msra.mxu0 0.0
      %741 = vmatpush.msra.mxu0 0.0
      %742 = vmatpush.msra.mxu0 0.0
      %743 = vmatpush.msra.mxu0 0.0
      %744 = vmatpush.msra.mxu0 0.0
      %745 = vmatpush.msra.mxu0 0.0
      %746 = vmatpush.msra.mxu0 0.0
      %747 = vmatpush.msra.mxu0 %v721
      %748 = vmatpush.msra.mxu0 %v720
      %749 = vmatmul.f32.gmra.mxu0 %v728
      %v750 = vpop.f32.mrf.mxu0
      %v751 = vadd.f32 0.0, %v750
      %752 = vmatmul.f32.gmra.mxu0 %v731
      %v753 = vpop.f32.mrf.mxu0
      %v754 = vadd.f32 0.0, %v753
      %755 = vdwg.mxu0
      %756 = vmatpush.msra.mxu0 0.0
      %757 = vmatpush.msra.mxu0 0.0
      %758 = vmatpush.msra.mxu0 0.0
      %759 = vmatpush.msra.mxu0 0.0
      %760 = vmatpush.msra.mxu0 0.0
      %761 = vmatpush.msra.mxu0 0.0
      %762 = vmatpush.msra.mxu0 0.0
      %763 = vmatpush.msra.mxu0 0.0
      %764 = vmatpush.msra.mxu0 0.0
      %765 = vmatpush.msra.mxu0 0.0
      %766 = vmatpush.msra.mxu0 0.0
      %767 = vmatpush.msra.mxu0 0.0
      %768 = vmatpush.msra.mxu0 0.0
      %769 = vmatpush.msra.mxu0 0.0
      %770 = vmatpush.msra.mxu0 %v723
      %771 = vmatpush.msra.mxu0 %v722
      %772 = vmatmul.f32.gmra.mxu0 %v728
      %v773 = vpop.f32.mrf.mxu0
      %v774 = vadd.f32 0.0, %v773
      %775 = vmatmul.f32.gmra.mxu0 %v731
      %v776 = vpop.f32.mrf.mxu0
      %v777 = vadd.f32 0.0, %v776
      %778 = vdwg.mxu0
      %v779 = vperm.slane %v256, 6
      %v780 = vperm.slane %v257, 6
      %v781 = vmul.f32 %v751, %v779
      %v782 = vmul.f32 %v774, %v780
      %v783 = vmul.f32 %v754, %v779
      %v784 = vmul.f32 %v777, %v780
      %v785 = vadd.f32 %v707, %v781
      %v786 = vadd.f32 %v708, %v782
      %v787 = vadd.f32 %v709, %v783
      %v788 = vadd.f32 %v710, %v784
      %789 = vrot.lane.b32.xlu0 %v252, 112
      %v790 = vpop.permute.xlu0 %789
      %791 = vrot.lane.b32.xlu0 %v254, 112
      %v792 = vpop.permute.xlu0 %791
      %793 = vrot.lane.b32.xlu0 %v253, 112
      %v794 = vpop.permute.xlu0 %793
      %795 = vrot.lane.b32.xlu0 %v255, 112
      %v796 = vpop.permute.xlu0 %795
      %vm797 = vcmp.lt.s32.totalorder %v269, 112
      %v798 = vsel %vm797, %v790, %v794
      %v799 = vsel %vm797, %v792, %v796
      %v800 = vsel %vm797, %v794, %v790
      %v801 = vsel %vm797, %v796, %v792
      %s802 = scalar_lea.vmem %s1, 112
      %v803 = vld [vmem:[%s802] sm:$0xff]
      %v804 = vld [vmem:[%s802 + $0x8] sm:$0xff]
      %v806 = vsel %vm277, %v803, 0
      %v809 = vsel %vm277, %v804, 0
      %811 = vmatpush.msra.mxu0 0.0
      %812 = vmatpush.msra.mxu0 0.0
      %813 = vmatpush.msra.mxu0 0.0
      %814 = vmatpush.msra.mxu0 0.0
      %815 = vmatpush.msra.mxu0 0.0
      %816 = vmatpush.msra.mxu0 0.0
      %817 = vmatpush.msra.mxu0 0.0
      %818 = vmatpush.msra.mxu0 0.0
      %819 = vmatpush.msra.mxu0 0.0
      %820 = vmatpush.msra.mxu0 0.0
      %821 = vmatpush.msra.mxu0 0.0
      %822 = vmatpush.msra.mxu0 0.0
      %823 = vmatpush.msra.mxu0 0.0
      %824 = vmatpush.msra.mxu0 0.0
      %825 = vmatpush.msra.mxu0 %v799
      %826 = vmatpush.msra.mxu0 %v798
      %827 = vmatmul.f32.gmra.mxu0 %v806
      %v828 = vpop.f32.mrf.mxu0
      %v829 = vadd.f32 0.0, %v828
      %830 = vmatmul.f32.gmra.mxu0 %v809
      %v831 = vpop.f32.mrf.mxu0
      %v832 = vadd.f32 0.0, %v831
      %833 = vdwg.mxu0
      %834 = vmatpush.msra.mxu0 0.0
      %835 = vmatpush.msra.mxu0 0.0
      %836 = vmatpush.msra.mxu0 0.0
      %837 = vmatpush.msra.mxu0 0.0
      %838 = vmatpush.msra.mxu0 0.0
      %839 = vmatpush.msra.mxu0 0.0
      %840 = vmatpush.msra.mxu0 0.0
      %841 = vmatpush.msra.mxu0 0.0
      %842 = vmatpush.msra.mxu0 0.0
      %843 = vmatpush.msra.mxu0 0.0
      %844 = vmatpush.msra.mxu0 0.0
      %845 = vmatpush.msra.mxu0 0.0
      %846 = vmatpush.msra.mxu0 0.0
      %847 = vmatpush.msra.mxu0 0.0
      %848 = vmatpush.msra.mxu0 %v801
      %849 = vmatpush.msra.mxu0 %v800
      %850 = vmatmul.f32.gmra.mxu0 %v806
      %v851 = vpop.f32.mrf.mxu0
      %v852 = vadd.f32 0.0, %v851
      %853 = vmatmul.f32.gmra.mxu0 %v809
      %v854 = vpop.f32.mrf.mxu0
      %v855 = vadd.f32 0.0, %v854
      %856 = vdwg.mxu0
      %v857 = vperm.slane %v256, 7
      %v858 = vperm.slane %v257, 7
      %v859 = vmul.f32 %v829, %v857
      %v860 = vmul.f32 %v852, %v858
      %v861 = vmul.f32 %v832, %v857
      %v862 = vmul.f32 %v855, %v858
      %v863 = vadd.f32 %v785, %v859
      %v864 = vadd.f32 %v786, %v860
      %v865 = vadd.f32 %v787, %v861
      %v866 = vadd.f32 %v788, %v862
      %867 = vrot.lane.b32.xlu0 %v252, 111
      %v868 = vpop.permute.xlu0 %867
      %869 = vrot.lane.b32.xlu0 %v254, 111
      %v870 = vpop.permute.xlu0 %869
      %871 = vrot.lane.b32.xlu0 %v253, 111
      %v872 = vpop.permute.xlu0 %871
      %873 = vrot.lane.b32.xlu0 %v255, 111
      %v874 = vpop.permute.xlu0 %873
      %vm875 = vcmp.lt.s32.totalorder %v269, 111
      %v876 = vsel %vm875, %v868, %v872
      %v877 = vsel %vm875, %v870, %v874
      %v878 = vsel %vm875, %v872, %v868
      %v879 = vsel %vm875, %v874, %v870
      %s880 = scalar_lea.vmem %s1, 128
      %v881 = vld [vmem:[%s880] sm:$0xff]
      %v882 = vld [vmem:[%s880 + $0x8] sm:$0xff]
      %v884 = vsel %vm277, %v881, 0
      %v887 = vsel %vm277, %v882, 0
      %889 = vmatpush.msra.mxu0 0.0
      %890 = vmatpush.msra.mxu0 0.0
      %891 = vmatpush.msra.mxu0 0.0
      %892 = vmatpush.msra.mxu0 0.0
      %893 = vmatpush.msra.mxu0 0.0
      %894 = vmatpush.msra.mxu0 0.0
      %895 = vmatpush.msra.mxu0 0.0
      %896 = vmatpush.msra.mxu0 0.0
      %897 = vmatpush.msra.mxu0 0.0
      %898 = vmatpush.msra.mxu0 0.0
      %899 = vmatpush.msra.mxu0 0.0
      %900 = vmatpush.msra.mxu0 0.0
      %901 = vmatpush.msra.mxu0 0.0
      %902 = vmatpush.msra.mxu0 0.0
      %903 = vmatpush.msra.mxu0 %v877
      %904 = vmatpush.msra.mxu0 %v876
      %905 = vmatmul.f32.gmra.mxu0 %v884
      %v906 = vpop.f32.mrf.mxu0
      %v907 = vadd.f32 0.0, %v906
      %908 = vmatmul.f32.gmra.mxu0 %v887
      %v909 = vpop.f32.mrf.mxu0
      %v910 = vadd.f32 0.0, %v909
      %911 = vdwg.mxu0
      %912 = vmatpush.msra.mxu0 0.0
      %913 = vmatpush.msra.mxu0 0.0
      %914 = vmatpush.msra.mxu0 0.0
      %915 = vmatpush.msra.mxu0 0.0
      %916 = vmatpush.msra.mxu0 0.0
      %917 = vmatpush.msra.mxu0 0.0
      %918 = vmatpush.msra.mxu0 0.0
      %919 = vmatpush.msra.mxu0 0.0
      %920 = vmatpush.msra.mxu0 0.0
      %921 = vmatpush.msra.mxu0 0.0
      %922 = vmatpush.msra.mxu0 0.0
      %923 = vmatpush.msra.mxu0 0.0
      %924 = vmatpush.msra.mxu0 0.0
      %925 = vmatpush.msra.mxu0 0.0
      %926 = vmatpush.msra.mxu0 %v879
      %927 = vmatpush.msra.mxu0 %v878
      %928 = vmatmul.f32.gmra.mxu0 %v884
      %v929 = vpop.f32.mrf.mxu0
      %v930 = vadd.f32 0.0, %v929
      %931 = vmatmul.f32.gmra.mxu0 %v887
      %v932 = vpop.f32.mrf.mxu0
      %v933 = vadd.f32 0.0, %v932
      %934 = vdwg.mxu0
      %v935 = vperm.slane %v258, 0
      %v936 = vperm.slane %v259, 0
      %v937 = vmul.f32 %v907, %v935
      %v938 = vmul.f32 %v930, %v936
      %v939 = vmul.f32 %v910, %v935
      %v940 = vmul.f32 %v933, %v936
      %v941 = vadd.f32 %v863, %v937
      %v942 = vadd.f32 %v864, %v938
      %v943 = vadd.f32 %v865, %v939
      %v944 = vadd.f32 %v866, %v940
      %v945 = vld [vmem:[%s2] sm:$0xff]
      %v946 = vld [vmem:[%s2 + $0x8] sm:$0xff]
      %948 = vset.pattern.permute.xlu0 0
      %949 = vperm.xlu0 %948, %v945
      %v950 = vpop.permute.xlu0 %949
      %953 = vset.pattern.permute.xlu0 0
      %954 = vperm.xlu0 %953, %v946
      %v955 = vpop.permute.xlu0 %954
      %v957 = vadd.f32 %v941, %v950
      %v958 = vadd.f32 %v942, %v950
      %v959 = vadd.f32 %v943, %v955
      %v960 = vadd.f32 %v944, %v955
      %v961 = vmax.f32 %v957, 0.0
      %v962 = vmax.f32 %v958, 0.0
      %v963 = vmax.f32 %v959, 0.0
      %v964 = vmax.f32 %v960, 0.0
      %965 = vrot.lane.b32.xlu0 %v961, 17
      %v966 = vpop.permute.xlu0 %965
      %967 = vrot.lane.b32.xlu0 %v963, 17
      %v968 = vpop.permute.xlu0 %967
      %969 = vrot.lane.b32.xlu0 %v962, 17
      %v970 = vpop.permute.xlu0 %969
      %971 = vrot.lane.b32.xlu0 %v964, 17
      %v972 = vpop.permute.xlu0 %971
      %v973 = vsel %vm270, %v966, %v970
      %v974 = vsel %vm270, %v968, %v972
      %v975 = vsel %vm270, %v970, %v966
      %v976 = vsel %vm270, %v972, %v968
      %s977 = scalar_lea.vmem %s1, 144
      %v978 = vld [vmem:[%s977] sm:$0xff]
      %v979 = vld [vmem:[%s977 + $0x8] sm:$0xff]
      %v981 = vsel %vm277, %v978, 0
      %v984 = vsel %vm277, %v979, 0
      %986 = vmatpush.msra.mxu0 0.0
      %987 = vmatpush.msra.mxu0 0.0
      %988 = vmatpush.msra.mxu0 0.0
      %989 = vmatpush.msra.mxu0 0.0
      %990 = vmatpush.msra.mxu0 0.0
      %991 = vmatpush.msra.mxu0 0.0
      %992 = vmatpush.msra.mxu0 0.0
      %993 = vmatpush.msra.mxu0 0.0
      %994 = vmatpush.msra.mxu0 0.0
      %995 = vmatpush.msra.mxu0 0.0
      %996 = vmatpush.msra.mxu0 0.0
      %997 = vmatpush.msra.mxu0 0.0
      %998 = vmatpush.msra.mxu0 0.0
      %999 = vmatpush.msra.mxu0 0.0
      %1000 = vmatpush.msra.mxu0 %v976
      %1001 = vmatpush.msra.mxu0 %v975
      %1002 = vmatmul.f32.gmra.mxu0 %v981
      %v1003 = vpop.f32.mrf.mxu0
      %v1004 = vadd.f32 0.0, %v1003
      %1005 = vmatmul.f32.gmra.mxu0 %v984
      %v1006 = vpop.f32.mrf.mxu0
      %v1007 = vadd.f32 0.0, %v1006
      %1008 = vdwg.mxu0
      %1009 = vmatpush.msra.mxu0 0.0
      %1010 = vmatpush.msra.mxu0 0.0
      %1011 = vmatpush.msra.mxu0 0.0
      %1012 = vmatpush.msra.mxu0 0.0
      %1013 = vmatpush.msra.mxu0 0.0
      %1014 = vmatpush.msra.mxu0 0.0
      %1015 = vmatpush.msra.mxu0 0.0
      %1016 = vmatpush.msra.mxu0 0.0
      %1017 = vmatpush.msra.mxu0 0.0
      %1018 = vmatpush.msra.mxu0 0.0
      %1019 = vmatpush.msra.mxu0 0.0
      %1020 = vmatpush.msra.mxu0 0.0
      %1021 = vmatpush.msra.mxu0 0.0
      %1022 = vmatpush.msra.mxu0 0.0
      %1023 = vmatpush.msra.mxu0 %v974
      %1024 = vmatpush.msra.mxu0 %v973
      %1025 = vmatmul.f32.gmra.mxu0 %v981
      %v1026 = vpop.f32.mrf.mxu0
      %v1027 = vadd.f32 0.0, %v1026
      %1028 = vmatmul.f32.gmra.mxu0 %v984
      %v1029 = vpop.f32.mrf.mxu0
      %v1030 = vadd.f32 0.0, %v1029
      %1031 = vdwg.mxu0
      %v1032 = vmul.f32 %v1004, %v330
      %v1033 = vmul.f32 %v1027, %v331
      %v1034 = vmul.f32 %v1007, %v330
      %v1035 = vmul.f32 %v1030, %v331
      %v1036 = vadd.f32 %v1032, 0.0
      %v1037 = vadd.f32 %v1033, 0.0
      %v1038 = vadd.f32 %v1034, 0.0
      %v1039 = vadd.f32 %v1035, 0.0
      %1040 = vrot.lane.b32.xlu0 %v961, 16
      %v1041 = vpop.permute.xlu0 %1040
      %1042 = vrot.lane.b32.xlu0 %v963, 16
      %v1043 = vpop.permute.xlu0 %1042
      %1044 = vrot.lane.b32.xlu0 %v962, 16
      %v1045 = vpop.permute.xlu0 %1044
      %1046 = vrot.lane.b32.xlu0 %v964, 16
      %v1047 = vpop.permute.xlu0 %1046
      %v1048 = vsel %vm348, %v1041, %v1045
      %v1049 = vsel %vm348, %v1043, %v1047
      %v1050 = vsel %vm348, %v1045, %v1041
      %v1051 = vsel %vm348, %v1047, %v1043
      %s1052 = scalar_lea.vmem %s1, 160
      %v1053 = vld [vmem:[%s1052] sm:$0xff]
      %v1054 = vld [vmem:[%s1052 + $0x8] sm:$0xff]
      %v1056 = vsel %vm277, %v1053, 0
      %v1059 = vsel %vm277, %v1054, 0
      %1061 = vmatpush.msra.mxu0 0.0
      %1062 = vmatpush.msra.mxu0 0.0
      %1063 = vmatpush.msra.mxu0 0.0
      %1064 = vmatpush.msra.mxu0 0.0
      %1065 = vmatpush.msra.mxu0 0.0
      %1066 = vmatpush.msra.mxu0 0.0
      %1067 = vmatpush.msra.mxu0 0.0
      %1068 = vmatpush.msra.mxu0 0.0
      %1069 = vmatpush.msra.mxu0 0.0
      %1070 = vmatpush.msra.mxu0 0.0
      %1071 = vmatpush.msra.mxu0 0.0
      %1072 = vmatpush.msra.mxu0 0.0
      %1073 = vmatpush.msra.mxu0 0.0
      %1074 = vmatpush.msra.mxu0 0.0
      %1075 = vmatpush.msra.mxu0 %v1051
      %1076 = vmatpush.msra.mxu0 %v1050
      %1077 = vmatmul.f32.gmra.mxu0 %v1056
      %v1078 = vpop.f32.mrf.mxu0
      %v1079 = vadd.f32 0.0, %v1078
      %1080 = vmatmul.f32.gmra.mxu0 %v1059
      %v1081 = vpop.f32.mrf.mxu0
      %v1082 = vadd.f32 0.0, %v1081
      %1083 = vdwg.mxu0
      %1084 = vmatpush.msra.mxu0 0.0
      %1085 = vmatpush.msra.mxu0 0.0
      %1086 = vmatpush.msra.mxu0 0.0
      %1087 = vmatpush.msra.mxu0 0.0
      %1088 = vmatpush.msra.mxu0 0.0
      %1089 = vmatpush.msra.mxu0 0.0
      %1090 = vmatpush.msra.mxu0 0.0
      %1091 = vmatpush.msra.mxu0 0.0
      %1092 = vmatpush.msra.mxu0 0.0
      %1093 = vmatpush.msra.mxu0 0.0
      %1094 = vmatpush.msra.mxu0 0.0
      %1095 = vmatpush.msra.mxu0 0.0
      %1096 = vmatpush.msra.mxu0 0.0
      %1097 = vmatpush.msra.mxu0 0.0
      %1098 = vmatpush.msra.mxu0 %v1049
      %1099 = vmatpush.msra.mxu0 %v1048
      %1100 = vmatmul.f32.gmra.mxu0 %v1056
      %v1101 = vpop.f32.mrf.mxu0
      %v1102 = vadd.f32 0.0, %v1101
      %1103 = vmatmul.f32.gmra.mxu0 %v1059
      %v1104 = vpop.f32.mrf.mxu0
      %v1105 = vadd.f32 0.0, %v1104
      %1106 = vdwg.mxu0
      %v1107 = vmul.f32 %v1079, %v408
      %v1108 = vmul.f32 %v1102, %v409
      %v1109 = vmul.f32 %v1082, %v408
      %v1110 = vmul.f32 %v1105, %v409
      %v1111 = vadd.f32 %v1036, %v1107
      %v1112 = vadd.f32 %v1037, %v1108
      %v1113 = vadd.f32 %v1038, %v1109
      %v1114 = vadd.f32 %v1039, %v1110
      %1115 = vrot.lane.b32.xlu0 %v961, 15
      %v1116 = vpop.permute.xlu0 %1115
      %1117 = vrot.lane.b32.xlu0 %v963, 15
      %v1118 = vpop.permute.xlu0 %1117
      %1119 = vrot.lane.b32.xlu0 %v962, 15
      %v1120 = vpop.permute.xlu0 %1119
      %1121 = vrot.lane.b32.xlu0 %v964, 15
      %v1122 = vpop.permute.xlu0 %1121
      %v1123 = vsel %vm426, %v1116, %v1120
      %v1124 = vsel %vm426, %v1118, %v1122
      %v1125 = vsel %vm426, %v1120, %v1116
      %v1126 = vsel %vm426, %v1122, %v1118
      %s1127 = scalar_lea.vmem %s1, 176
      %v1128 = vld [vmem:[%s1127] sm:$0xff]
      %v1129 = vld [vmem:[%s1127 + $0x8] sm:$0xff]
      %v1131 = vsel %vm277, %v1128, 0
      %v1134 = vsel %vm277, %v1129, 0
      %1136 = vmatpush.msra.mxu0 0.0
      %1137 = vmatpush.msra.mxu0 0.0
      %1138 = vmatpush.msra.mxu0 0.0
      %1139 = vmatpush.msra.mxu0 0.0
      %1140 = vmatpush.msra.mxu0 0.0
      %1141 = vmatpush.msra.mxu0 0.0
      %1142 = vmatpush.msra.mxu0 0.0
      %1143 = vmatpush.msra.mxu0 0.0
      %1144 = vmatpush.msra.mxu0 0.0
      %1145 = vmatpush.msra.mxu0 0.0
      %1146 = vmatpush.msra.mxu0 0.0
      %1147 = vmatpush.msra.mxu0 0.0
      %1148 = vmatpush.msra.mxu0 0.0
      %1149 = vmatpush.msra.mxu0 0.0
      %1150 = vmatpush.msra.mxu0 %v1126
      %1151 = vmatpush.msra.mxu0 %v1125
      %1152 = vmatmul.f32.gmra.mxu0 %v1131
      %v1153 = vpop.f32.mrf.mxu0
      %v1154 = vadd.f32 0.0, %v1153
      %1155 = vmatmul.f32.gmra.mxu0 %v1134
      %v1156 = vpop.f32.mrf.mxu0
      %v1157 = vadd.f32 0.0, %v1156
      %1158 = vdwg.mxu0
      %1159 = vmatpush.msra.mxu0 0.0
      %1160 = vmatpush.msra.mxu0 0.0
      %1161 = vmatpush.msra.mxu0 0.0
      %1162 = vmatpush.msra.mxu0 0.0
      %1163 = vmatpush.msra.mxu0 0.0
      %1164 = vmatpush.msra.mxu0 0.0
      %1165 = vmatpush.msra.mxu0 0.0
      %1166 = vmatpush.msra.mxu0 0.0
      %1167 = vmatpush.msra.mxu0 0.0
      %1168 = vmatpush.msra.mxu0 0.0
      %1169 = vmatpush.msra.mxu0 0.0
      %1170 = vmatpush.msra.mxu0 0.0
      %1171 = vmatpush.msra.mxu0 0.0
      %1172 = vmatpush.msra.mxu0 0.0
      %1173 = vmatpush.msra.mxu0 %v1124
      %1174 = vmatpush.msra.mxu0 %v1123
      %1175 = vmatmul.f32.gmra.mxu0 %v1131
      %v1176 = vpop.f32.mrf.mxu0
      %v1177 = vadd.f32 0.0, %v1176
      %1178 = vmatmul.f32.gmra.mxu0 %v1134
      %v1179 = vpop.f32.mrf.mxu0
      %v1180 = vadd.f32 0.0, %v1179
      %1181 = vdwg.mxu0
      %v1182 = vmul.f32 %v1154, %v486
      %v1183 = vmul.f32 %v1177, %v487
      %v1184 = vmul.f32 %v1157, %v486
      %v1185 = vmul.f32 %v1180, %v487
      %v1186 = vadd.f32 %v1111, %v1182
      %v1187 = vadd.f32 %v1112, %v1183
      %v1188 = vadd.f32 %v1113, %v1184
      %v1189 = vadd.f32 %v1114, %v1185
      %1190 = vrot.lane.b32.xlu0 %v961, 1
      %v1191 = vpop.permute.xlu0 %1190
      %1192 = vrot.lane.b32.xlu0 %v963, 1
      %v1193 = vpop.permute.xlu0 %1192
      %1194 = vrot.lane.b32.xlu0 %v962, 1
      %v1195 = vpop.permute.xlu0 %1194
      %1196 = vrot.lane.b32.xlu0 %v964, 1
      %v1197 = vpop.permute.xlu0 %1196
      %v1198 = vsel %vm504, %v1191, %v1195
      %v1199 = vsel %vm504, %v1193, %v1197
      %v1200 = vsel %vm504, %v1195, %v1191
      %v1201 = vsel %vm504, %v1197, %v1193
      %s1202 = scalar_lea.vmem %s1, 192
      %v1203 = vld [vmem:[%s1202] sm:$0xff]
      %v1204 = vld [vmem:[%s1202 + $0x8] sm:$0xff]
      %v1206 = vsel %vm277, %v1203, 0
      %v1209 = vsel %vm277, %v1204, 0
      %1211 = vmatpush.msra.mxu0 0.0
      %1212 = vmatpush.msra.mxu0 0.0
      %1213 = vmatpush.msra.mxu0 0.0
      %1214 = vmatpush.msra.mxu0 0.0
      %1215 = vmatpush.msra.mxu0 0.0
      %1216 = vmatpush.msra.mxu0 0.0
      %1217 = vmatpush.msra.mxu0 0.0
      %1218 = vmatpush.msra.mxu0 0.0
      %1219 = vmatpush.msra.mxu0 0.0
      %1220 = vmatpush.msra.mxu0 0.0
      %1221 = vmatpush.msra.mxu0 0.0
      %1222 = vmatpush.msra.mxu0 0.0
      %1223 = vmatpush.msra.mxu0 0.0
      %1224 = vmatpush.msra.mxu0 0.0
      %1225 = vmatpush.msra.mxu0 %v1201
      %1226 = vmatpush.msra.mxu0 %v1200
      %1227 = vmatmul.f32.gmra.mxu0 %v1206
      %v1228 = vpop.f32.mrf.mxu0
      %v1229 = vadd.f32 0.0, %v1228
      %1230 = vmatmul.f32.gmra.mxu0 %v1209
      %v1231 = vpop.f32.mrf.mxu0
      %v1232 = vadd.f32 0.0, %v1231
      %1233 = vdwg.mxu0
      %1234 = vmatpush.msra.mxu0 0.0
      %1235 = vmatpush.msra.mxu0 0.0
      %1236 = vmatpush.msra.mxu0 0.0
      %1237 = vmatpush.msra.mxu0 0.0
      %1238 = vmatpush.msra.mxu0 0.0
      %1239 = vmatpush.msra.mxu0 0.0
      %1240 = vmatpush.msra.mxu0 0.0
      %1241 = vmatpush.msra.mxu0 0.0
      %1242 = vmatpush.msra.mxu0 0.0
      %1243 = vmatpush.msra.mxu0 0.0
      %1244 = vmatpush.msra.mxu0 0.0
      %1245 = vmatpush.msra.mxu0 0.0
      %1246 = vmatpush.msra.mxu0 0.0
      %1247 = vmatpush.msra.mxu0 0.0
      %1248 = vmatpush.msra.mxu0 %v1199
      %1249 = vmatpush.msra.mxu0 %v1198
      %1250 = vmatmul.f32.gmra.mxu0 %v1206
      %v1251 = vpop.f32.mrf.mxu0
      %v1252 = vadd.f32 0.0, %v1251
      %1253 = vmatmul.f32.gmra.mxu0 %v1209
      %v1254 = vpop.f32.mrf.mxu0
      %v1255 = vadd.f32 0.0, %v1254
      %1256 = vdwg.mxu0
      %v1257 = vmul.f32 %v1229, %v564
      %v1258 = vmul.f32 %v1252, %v565
      %v1259 = vmul.f32 %v1232, %v564
      %v1260 = vmul.f32 %v1255, %v565
      %v1261 = vadd.f32 %v1186, %v1257
      %v1262 = vadd.f32 %v1187, %v1258
      %v1263 = vadd.f32 %v1188, %v1259
      %v1264 = vadd.f32 %v1189, %v1260
      %s1265 = scalar_lea.vmem %s1, 208
      %v1266 = vld [vmem:[%s1265] sm:$0xff]
      %v1267 = vld [vmem:[%s1265 + $0x8] sm:$0xff]
      %v1269 = vsel %vm277, %v1266, 0
      %v1272 = vsel %vm277, %v1267, 0
      %1274 = vmatpush.msra.mxu0 0.0
      %1275 = vmatpush.msra.mxu0 0.0
      %1276 = vmatpush.msra.mxu0 0.0
      %1277 = vmatpush.msra.mxu0 0.0
      %1278 = vmatpush.msra.mxu0 0.0
      %1279 = vmatpush.msra.mxu0 0.0
      %1280 = vmatpush.msra.mxu0 0.0
      %1281 = vmatpush.msra.mxu0 0.0
      %1282 = vmatpush.msra.mxu0 0.0
      %1283 = vmatpush.msra.mxu0 0.0
      %1284 = vmatpush.msra.mxu0 0.0
      %1285 = vmatpush.msra.mxu0 0.0
      %1286 = vmatpush.msra.mxu0 0.0
      %1287 = vmatpush.msra.mxu0 0.0
      %1288 = vmatpush.msra.mxu0 %v963
      %1289 = vmatpush.msra.mxu0 %v961
      %1290 = vmatmul.f32.gmra.mxu0 %v1269
      %v1291 = vpop.f32.mrf.mxu0
      %v1292 = vadd.f32 0.0, %v1291
      %1293 = vmatmul.f32.gmra.mxu0 %v1272
      %v1294 = vpop.f32.mrf.mxu0
      %v1295 = vadd.f32 0.0, %v1294
      %1296 = vdwg.mxu0
      %1297 = vmatpush.msra.mxu0 0.0
      %1298 = vmatpush.msra.mxu0 0.0
      %1299 = vmatpush.msra.mxu0 0.0
      %1300 = vmatpush.msra.mxu0 0.0
      %1301 = vmatpush.msra.mxu0 0.0
      %1302 = vmatpush.msra.mxu0 0.0
      %1303 = vmatpush.msra.mxu0 0.0
      %1304 = vmatpush.msra.mxu0 0.0
      %1305 = vmatpush.msra.mxu0 0.0
      %1306 = vmatpush.msra.mxu0 0.0
      %1307 = vmatpush.msra.mxu0 0.0
      %1308 = vmatpush.msra.mxu0 0.0
      %1309 = vmatpush.msra.mxu0 0.0
      %1310 = vmatpush.msra.mxu0 0.0
      %1311 = vmatpush.msra.mxu0 %v964
      %1312 = vmatpush.msra.mxu0 %v962
      %1313 = vmatmul.f32.gmra.mxu0 %v1269
      %v1314 = vpop.f32.mrf.mxu0
      %v1315 = vadd.f32 0.0, %v1314
      %1316 = vmatmul.f32.gmra.mxu0 %v1272
      %v1317 = vpop.f32.mrf.mxu0
      %v1318 = vadd.f32 0.0, %v1317
      %1319 = vdwg.mxu0
      %v1320 = vadd.f32 %v1261, %v1292
      %v1321 = vadd.f32 %v1262, %v1315
      %v1322 = vadd.f32 %v1263, %v1295
      %v1323 = vadd.f32 %v1264, %v1318
      %1324 = vrot.lane.b32.xlu0 %v961, 127
      %v1325 = vpop.permute.xlu0 %1324
      %1326 = vrot.lane.b32.xlu0 %v963, 127
      %v1327 = vpop.permute.xlu0 %1326
      %1328 = vrot.lane.b32.xlu0 %v962, 127
      %v1329 = vpop.permute.xlu0 %1328
      %1330 = vrot.lane.b32.xlu0 %v964, 127
      %v1331 = vpop.permute.xlu0 %1330
      %v1332 = vsel %vm641, %v1325, %v1329
      %v1333 = vsel %vm641, %v1327, %v1331
      %v1334 = vsel %vm641, %v1329, %v1325
      %v1335 = vsel %vm641, %v1331, %v1327
      %s1336 = scalar_lea.vmem %s1, 224
      %v1337 = vld [vmem:[%s1336] sm:$0xff]
      %v1338 = vld [vmem:[%s1336 + $0x8] sm:$0xff]
      %v1340 = vsel %vm277, %v1337, 0
      %v1343 = vsel %vm277, %v1338, 0
      %1345 = vmatpush.msra.mxu0 0.0
      %1346 = vmatpush.msra.mxu0 0.0
      %1347 = vmatpush.msra.mxu0 0.0
      %1348 = vmatpush.msra.mxu0 0.0
      %1349 = vmatpush.msra.mxu0 0.0
      %1350 = vmatpush.msra.mxu0 0.0
      %1351 = vmatpush.msra.mxu0 0.0
      %1352 = vmatpush.msra.mxu0 0.0
      %1353 = vmatpush.msra.mxu0 0.0
      %1354 = vmatpush.msra.mxu0 0.0
      %1355 = vmatpush.msra.mxu0 0.0
      %1356 = vmatpush.msra.mxu0 0.0
      %1357 = vmatpush.msra.mxu0 0.0
      %1358 = vmatpush.msra.mxu0 0.0
      %1359 = vmatpush.msra.mxu0 %v1333
      %1360 = vmatpush.msra.mxu0 %v1332
      %1361 = vmatmul.f32.gmra.mxu0 %v1340
      %v1362 = vpop.f32.mrf.mxu0
      %v1363 = vadd.f32 0.0, %v1362
      %1364 = vmatmul.f32.gmra.mxu0 %v1343
      %v1365 = vpop.f32.mrf.mxu0
      %v1366 = vadd.f32 0.0, %v1365
      %1367 = vdwg.mxu0
      %1368 = vmatpush.msra.mxu0 0.0
      %1369 = vmatpush.msra.mxu0 0.0
      %1370 = vmatpush.msra.mxu0 0.0
      %1371 = vmatpush.msra.mxu0 0.0
      %1372 = vmatpush.msra.mxu0 0.0
      %1373 = vmatpush.msra.mxu0 0.0
      %1374 = vmatpush.msra.mxu0 0.0
      %1375 = vmatpush.msra.mxu0 0.0
      %1376 = vmatpush.msra.mxu0 0.0
      %1377 = vmatpush.msra.mxu0 0.0
      %1378 = vmatpush.msra.mxu0 0.0
      %1379 = vmatpush.msra.mxu0 0.0
      %1380 = vmatpush.msra.mxu0 0.0
      %1381 = vmatpush.msra.mxu0 0.0
      %1382 = vmatpush.msra.mxu0 %v1335
      %1383 = vmatpush.msra.mxu0 %v1334
      %1384 = vmatmul.f32.gmra.mxu0 %v1340
      %v1385 = vpop.f32.mrf.mxu0
      %v1386 = vadd.f32 0.0, %v1385
      %1387 = vmatmul.f32.gmra.mxu0 %v1343
      %v1388 = vpop.f32.mrf.mxu0
      %v1389 = vadd.f32 0.0, %v1388
      %1390 = vdwg.mxu0
      %v1391 = vmul.f32 %v1363, %v701
      %v1392 = vmul.f32 %v1386, %v702
      %v1393 = vmul.f32 %v1366, %v701
      %v1394 = vmul.f32 %v1389, %v702
      %v1395 = vadd.f32 %v1320, %v1391
      %v1396 = vadd.f32 %v1321, %v1392
      %v1397 = vadd.f32 %v1322, %v1393
      %v1398 = vadd.f32 %v1323, %v1394
      %1399 = vrot.lane.b32.xlu0 %v961, 113
      %v1400 = vpop.permute.xlu0 %1399
      %1401 = vrot.lane.b32.xlu0 %v963, 113
      %v1402 = vpop.permute.xlu0 %1401
      %1403 = vrot.lane.b32.xlu0 %v962, 113
      %v1404 = vpop.permute.xlu0 %1403
      %1405 = vrot.lane.b32.xlu0 %v964, 113
      %v1406 = vpop.permute.xlu0 %1405
      %v1407 = vsel %vm719, %v1400, %v1404
      %v1408 = vsel %vm719, %v1402, %v1406
      %v1409 = vsel %vm719, %v1404, %v1400
      %v1410 = vsel %vm719, %v1406, %v1402
      %s1411 = scalar_lea.vmem %s1, 240
      %v1412 = vld [vmem:[%s1411] sm:$0xff]
      %v1413 = vld [vmem:[%s1411 + $0x8] sm:$0xff]
      %v1415 = vsel %vm277, %v1412, 0
      %v1418 = vsel %vm277, %v1413, 0
      %1420 = vmatpush.msra.mxu0 0.0
      %1421 = vmatpush.msra.mxu0 0.0
      %1422 = vmatpush.msra.mxu0 0.0
      %1423 = vmatpush.msra.mxu0 0.0
      %1424 = vmatpush.msra.mxu0 0.0
      %1425 = vmatpush.msra.mxu0 0.0
      %1426 = vmatpush.msra.mxu0 0.0
      %1427 = vmatpush.msra.mxu0 0.0
      %1428 = vmatpush.msra.mxu0 0.0
      %1429 = vmatpush.msra.mxu0 0.0
      %1430 = vmatpush.msra.mxu0 0.0
      %1431 = vmatpush.msra.mxu0 0.0
      %1432 = vmatpush.msra.mxu0 0.0
      %1433 = vmatpush.msra.mxu0 0.0
      %1434 = vmatpush.msra.mxu0 %v1408
      %1435 = vmatpush.msra.mxu0 %v1407
      %1436 = vmatmul.f32.gmra.mxu0 %v1415
      %v1437 = vpop.f32.mrf.mxu0
      %v1438 = vadd.f32 0.0, %v1437
      %1439 = vmatmul.f32.gmra.mxu0 %v1418
      %v1440 = vpop.f32.mrf.mxu0
      %v1441 = vadd.f32 0.0, %v1440
      %1442 = vdwg.mxu0
      %1443 = vmatpush.msra.mxu0 0.0
      %1444 = vmatpush.msra.mxu0 0.0
      %1445 = vmatpush.msra.mxu0 0.0
      %1446 = vmatpush.msra.mxu0 0.0
      %1447 = vmatpush.msra.mxu0 0.0
      %1448 = vmatpush.msra.mxu0 0.0
      %1449 = vmatpush.msra.mxu0 0.0
      %1450 = vmatpush.msra.mxu0 0.0
      %1451 = vmatpush.msra.mxu0 0.0
      %1452 = vmatpush.msra.mxu0 0.0
      %1453 = vmatpush.msra.mxu0 0.0
      %1454 = vmatpush.msra.mxu0 0.0
      %1455 = vmatpush.msra.mxu0 0.0
      %1456 = vmatpush.msra.mxu0 0.0
      %1457 = vmatpush.msra.mxu0 %v1410
      %1458 = vmatpush.msra.mxu0 %v1409
      %1459 = vmatmul.f32.gmra.mxu0 %v1415
      %v1460 = vpop.f32.mrf.mxu0
      %v1461 = vadd.f32 0.0, %v1460
      %1462 = vmatmul.f32.gmra.mxu0 %v1418
      %v1463 = vpop.f32.mrf.mxu0
      %v1464 = vadd.f32 0.0, %v1463
      %1465 = vdwg.mxu0
      %v1466 = vmul.f32 %v1438, %v779
      %v1467 = vmul.f32 %v1461, %v780
      %v1468 = vmul.f32 %v1441, %v779
      %v1469 = vmul.f32 %v1464, %v780
      %v1470 = vadd.f32 %v1395, %v1466
      %v1471 = vadd.f32 %v1396, %v1467
      %v1472 = vadd.f32 %v1397, %v1468
      %v1473 = vadd.f32 %v1398, %v1469
      %1474 = vrot.lane.b32.xlu0 %v961, 112
      %v1475 = vpop.permute.xlu0 %1474
      %1476 = vrot.lane.b32.xlu0 %v963, 112
      %v1477 = vpop.permute.xlu0 %1476
      %1478 = vrot.lane.b32.xlu0 %v962, 112
      %v1479 = vpop.permute.xlu0 %1478
      %1480 = vrot.lane.b32.xlu0 %v964, 112
      %v1481 = vpop.permute.xlu0 %1480
      %v1482 = vsel %vm797, %v1475, %v1479
      %v1483 = vsel %vm797, %v1477, %v1481
      %v1484 = vsel %vm797, %v1479, %v1475
      %v1485 = vsel %vm797, %v1481, %v1477
      %s1486 = scalar_lea.vmem %s1, 256
      %v1487 = vld [vmem:[%s1486] sm:$0xff]
      %v1488 = vld [vmem:[%s1486 + $0x8] sm:$0xff]
      %v1490 = vsel %vm277, %v1487, 0
      %v1493 = vsel %vm277, %v1488, 0
      %1495 = vmatpush.msra.mxu0 0.0
      %1496 = vmatpush.msra.mxu0 0.0
      %1497 = vmatpush.msra.mxu0 0.0
      %1498 = vmatpush.msra.mxu0 0.0
      %1499 = vmatpush.msra.mxu0 0.0
      %1500 = vmatpush.msra.mxu0 0.0
      %1501 = vmatpush.msra.mxu0 0.0
      %1502 = vmatpush.msra.mxu0 0.0
      %1503 = vmatpush.msra.mxu0 0.0
      %1504 = vmatpush.msra.mxu0 0.0
      %1505 = vmatpush.msra.mxu0 0.0
      %1506 = vmatpush.msra.mxu0 0.0
      %1507 = vmatpush.msra.mxu0 0.0
      %1508 = vmatpush.msra.mxu0 0.0
      %1509 = vmatpush.msra.mxu0 %v1483
      %1510 = vmatpush.msra.mxu0 %v1482
      %1511 = vmatmul.f32.gmra.mxu0 %v1490
      %v1512 = vpop.f32.mrf.mxu0
      %v1513 = vadd.f32 0.0, %v1512
      %1514 = vmatmul.f32.gmra.mxu0 %v1493
      %v1515 = vpop.f32.mrf.mxu0
      %v1516 = vadd.f32 0.0, %v1515
      %1517 = vdwg.mxu0
      %1518 = vmatpush.msra.mxu0 0.0
      %1519 = vmatpush.msra.mxu0 0.0
      %1520 = vmatpush.msra.mxu0 0.0
      %1521 = vmatpush.msra.mxu0 0.0
      %1522 = vmatpush.msra.mxu0 0.0
      %1523 = vmatpush.msra.mxu0 0.0
      %1524 = vmatpush.msra.mxu0 0.0
      %1525 = vmatpush.msra.mxu0 0.0
      %1526 = vmatpush.msra.mxu0 0.0
      %1527 = vmatpush.msra.mxu0 0.0
      %1528 = vmatpush.msra.mxu0 0.0
      %1529 = vmatpush.msra.mxu0 0.0
      %1530 = vmatpush.msra.mxu0 0.0
      %1531 = vmatpush.msra.mxu0 0.0
      %1532 = vmatpush.msra.mxu0 %v1485
      %1533 = vmatpush.msra.mxu0 %v1484
      %1534 = vmatmul.f32.gmra.mxu0 %v1490
      %v1535 = vpop.f32.mrf.mxu0
      %v1536 = vadd.f32 0.0, %v1535
      %1537 = vmatmul.f32.gmra.mxu0 %v1493
      %v1538 = vpop.f32.mrf.mxu0
      %v1539 = vadd.f32 0.0, %v1538
      %1540 = vdwg.mxu0
      %v1541 = vmul.f32 %v1513, %v857
      %v1542 = vmul.f32 %v1536, %v858
      %v1543 = vmul.f32 %v1516, %v857
      %v1544 = vmul.f32 %v1539, %v858
      %v1545 = vadd.f32 %v1470, %v1541
      %v1546 = vadd.f32 %v1471, %v1542
      %v1547 = vadd.f32 %v1472, %v1543
      %v1548 = vadd.f32 %v1473, %v1544
      %1549 = vrot.lane.b32.xlu0 %v961, 111
      %v1550 = vpop.permute.xlu0 %1549
      %1551 = vrot.lane.b32.xlu0 %v963, 111
      %v1552 = vpop.permute.xlu0 %1551
      %1553 = vrot.lane.b32.xlu0 %v962, 111
      %v1554 = vpop.permute.xlu0 %1553
      %1555 = vrot.lane.b32.xlu0 %v964, 111
      %v1556 = vpop.permute.xlu0 %1555
      %v1557 = vsel %vm875, %v1550, %v1554
      %v1558 = vsel %vm875, %v1552, %v1556
      %v1559 = vsel %vm875, %v1554, %v1550
      %v1560 = vsel %vm875, %v1556, %v1552
      %s1561 = scalar_lea.vmem %s1, 272
      %v1562 = vld [vmem:[%s1561] sm:$0xff]
      %v1563 = vld [vmem:[%s1561 + $0x8] sm:$0xff]
      %v1565 = vsel %vm277, %v1562, 0
      %v1568 = vsel %vm277, %v1563, 0
      %1570 = vmatpush.msra.mxu0 0.0
      %1571 = vmatpush.msra.mxu0 0.0
      %1572 = vmatpush.msra.mxu0 0.0
      %1573 = vmatpush.msra.mxu0 0.0
      %1574 = vmatpush.msra.mxu0 0.0
      %1575 = vmatpush.msra.mxu0 0.0
      %1576 = vmatpush.msra.mxu0 0.0
      %1577 = vmatpush.msra.mxu0 0.0
      %1578 = vmatpush.msra.mxu0 0.0
      %1579 = vmatpush.msra.mxu0 0.0
      %1580 = vmatpush.msra.mxu0 0.0
      %1581 = vmatpush.msra.mxu0 0.0
      %1582 = vmatpush.msra.mxu0 0.0
      %1583 = vmatpush.msra.mxu0 0.0
      %1584 = vmatpush.msra.mxu0 %v1558
      %1585 = vmatpush.msra.mxu0 %v1557
      %1586 = vmatmul.f32.gmra.mxu0 %v1565
      %v1587 = vpop.f32.mrf.mxu0
      %v1588 = vadd.f32 0.0, %v1587
      %1589 = vmatmul.f32.gmra.mxu0 %v1568
      %v1590 = vpop.f32.mrf.mxu0
      %v1591 = vadd.f32 0.0, %v1590
      %1592 = vdwg.mxu0
      %1593 = vmatpush.msra.mxu0 0.0
      %1594 = vmatpush.msra.mxu0 0.0
      %1595 = vmatpush.msra.mxu0 0.0
      %1596 = vmatpush.msra.mxu0 0.0
      %1597 = vmatpush.msra.mxu0 0.0
      %1598 = vmatpush.msra.mxu0 0.0
      %1599 = vmatpush.msra.mxu0 0.0
      %1600 = vmatpush.msra.mxu0 0.0
      %1601 = vmatpush.msra.mxu0 0.0
      %1602 = vmatpush.msra.mxu0 0.0
      %1603 = vmatpush.msra.mxu0 0.0
      %1604 = vmatpush.msra.mxu0 0.0
      %1605 = vmatpush.msra.mxu0 0.0
      %1606 = vmatpush.msra.mxu0 0.0
      %1607 = vmatpush.msra.mxu0 %v1560
      %1608 = vmatpush.msra.mxu0 %v1559
      %1609 = vmatmul.f32.gmra.mxu0 %v1565
      %v1610 = vpop.f32.mrf.mxu0
      %v1611 = vadd.f32 0.0, %v1610
      %1612 = vmatmul.f32.gmra.mxu0 %v1568
      %v1613 = vpop.f32.mrf.mxu0
      %v1614 = vadd.f32 0.0, %v1613
      %1615 = vdwg.mxu0
      %v1616 = vmul.f32 %v1588, %v935
      %v1617 = vmul.f32 %v1611, %v936
      %v1618 = vmul.f32 %v1591, %v935
      %v1619 = vmul.f32 %v1614, %v936
      %v1620 = vadd.f32 %v1545, %v1616
      %v1621 = vadd.f32 %v1546, %v1617
      %v1622 = vadd.f32 %v1547, %v1618
      %v1623 = vadd.f32 %v1548, %v1619
      %s1624 = scalar_lea.vmem %s2, 16
      %v1625 = vld [vmem:[%s1624] sm:$0xff]
      %v1626 = vld [vmem:[%s1624 + $0x8] sm:$0xff]
      %1628 = vset.pattern.permute.xlu0 0
      %1629 = vperm.xlu0 %1628, %v1625
      %v1630 = vpop.permute.xlu0 %1629
      %1633 = vset.pattern.permute.xlu0 0
      %1634 = vperm.xlu0 %1633, %v1626
      %v1635 = vpop.permute.xlu0 %1634
      %v1637 = vadd.f32 %v1620, %v1630
      %v1638 = vadd.f32 %v1621, %v1630
      %v1639 = vadd.f32 %v1622, %v1635
      %v1640 = vadd.f32 %v1623, %v1635
      %v1641 = vmax.f32 %v1637, 0.0
      %v1642 = vmax.f32 %v1638, 0.0
      %v1643 = vmax.f32 %v1639, 0.0
      %v1644 = vmax.f32 %v1640, 0.0
      %1645 = vrot.lane.b32.xlu0 %v1641, 17
      %v1646 = vpop.permute.xlu0 %1645
      %1647 = vrot.lane.b32.xlu0 %v1643, 17
      %v1648 = vpop.permute.xlu0 %1647
      %1649 = vrot.lane.b32.xlu0 %v1642, 17
      %v1650 = vpop.permute.xlu0 %1649
      %1651 = vrot.lane.b32.xlu0 %v1644, 17
      %v1652 = vpop.permute.xlu0 %1651
      %v1653 = vsel %vm270, %v1646, %v1650
      %v1654 = vsel %vm270, %v1648, %v1652
      %v1655 = vsel %vm270, %v1650, %v1646
      %v1656 = vsel %vm270, %v1652, %v1648
      %s1657 = scalar_lea.vmem %s1, 288
      %v1658 = vld [vmem:[%s1657] sm:$0xff]
      %v1659 = vld [vmem:[%s1657 + $0x8] sm:$0xff]
      %v1661 = vsel %vm277, %v1658, 0
      %v1664 = vsel %vm277, %v1659, 0
      %1666 = vmatpush.msra.mxu0 0.0
      %1667 = vmatpush.msra.mxu0 0.0
      %1668 = vmatpush.msra.mxu0 0.0
      %1669 = vmatpush.msra.mxu0 0.0
      %1670 = vmatpush.msra.mxu0 0.0
      %1671 = vmatpush.msra.mxu0 0.0
      %1672 = vmatpush.msra.mxu0 0.0
      %1673 = vmatpush.msra.mxu0 0.0
      %1674 = vmatpush.msra.mxu0 0.0
      %1675 = vmatpush.msra.mxu0 0.0
      %1676 = vmatpush.msra.mxu0 0.0
      %1677 = vmatpush.msra.mxu0 0.0
      %1678 = vmatpush.msra.mxu0 0.0
      %1679 = vmatpush.msra.mxu0 0.0
      %1680 = vmatpush.msra.mxu0 %v1656
      %1681 = vmatpush.msra.mxu0 %v1655
      %1682 = vmatmul.f32.gmra.mxu0 %v1661
      %v1683 = vpop.f32.mrf.mxu0
      %v1684 = vadd.f32 0.0, %v1683
      %1685 = vmatmul.f32.gmra.mxu0 %v1664
      %v1686 = vpop.f32.mrf.mxu0
      %v1687 = vadd.f32 0.0, %v1686
      %1688 = vdwg.mxu0
      %1689 = vmatpush.msra.mxu0 0.0
      %1690 = vmatpush.msra.mxu0 0.0
      %1691 = vmatpush.msra.mxu0 0.0
      %1692 = vmatpush.msra.mxu0 0.0
      %1693 = vmatpush.msra.mxu0 0.0
      %1694 = vmatpush.msra.mxu0 0.0
      %1695 = vmatpush.msra.mxu0 0.0
      %1696 = vmatpush.msra.mxu0 0.0
      %1697 = vmatpush.msra.mxu0 0.0
      %1698 = vmatpush.msra.mxu0 0.0
      %1699 = vmatpush.msra.mxu0 0.0
      %1700 = vmatpush.msra.mxu0 0.0
      %1701 = vmatpush.msra.mxu0 0.0
      %1702 = vmatpush.msra.mxu0 0.0
      %1703 = vmatpush.msra.mxu0 %v1654
      %1704 = vmatpush.msra.mxu0 %v1653
      %1705 = vmatmul.f32.gmra.mxu0 %v1661
      %v1706 = vpop.f32.mrf.mxu0
      %v1707 = vadd.f32 0.0, %v1706
      %1708 = vmatmul.f32.gmra.mxu0 %v1664
      %v1709 = vpop.f32.mrf.mxu0
      %v1710 = vadd.f32 0.0, %v1709
      %1711 = vdwg.mxu0
      %v1712 = vmul.f32 %v1684, %v330
      %v1713 = vmul.f32 %v1707, %v331
      %v1714 = vmul.f32 %v1687, %v330
      %v1715 = vmul.f32 %v1710, %v331
      %v1716 = vadd.f32 %v1712, 0.0
      %v1717 = vadd.f32 %v1713, 0.0
      %v1718 = vadd.f32 %v1714, 0.0
      %v1719 = vadd.f32 %v1715, 0.0
      %1720 = vrot.lane.b32.xlu0 %v1641, 16
      %v1721 = vpop.permute.xlu0 %1720
      %1722 = vrot.lane.b32.xlu0 %v1643, 16
      %v1723 = vpop.permute.xlu0 %1722
      %1724 = vrot.lane.b32.xlu0 %v1642, 16
      %v1725 = vpop.permute.xlu0 %1724
      %1726 = vrot.lane.b32.xlu0 %v1644, 16
      %v1727 = vpop.permute.xlu0 %1726
      %v1728 = vsel %vm348, %v1721, %v1725
      %v1729 = vsel %vm348, %v1723, %v1727
      %v1730 = vsel %vm348, %v1725, %v1721
      %v1731 = vsel %vm348, %v1727, %v1723
      %s1732 = scalar_lea.vmem %s1, 304
      %v1733 = vld [vmem:[%s1732] sm:$0xff]
      %v1734 = vld [vmem:[%s1732 + $0x8] sm:$0xff]
      %v1736 = vsel %vm277, %v1733, 0
      %v1739 = vsel %vm277, %v1734, 0
      %1741 = vmatpush.msra.mxu0 0.0
      %1742 = vmatpush.msra.mxu0 0.0
      %1743 = vmatpush.msra.mxu0 0.0
      %1744 = vmatpush.msra.mxu0 0.0
      %1745 = vmatpush.msra.mxu0 0.0
      %1746 = vmatpush.msra.mxu0 0.0
      %1747 = vmatpush.msra.mxu0 0.0
      %1748 = vmatpush.msra.mxu0 0.0
      %1749 = vmatpush.msra.mxu0 0.0
      %1750 = vmatpush.msra.mxu0 0.0
      %1751 = vmatpush.msra.mxu0 0.0
      %1752 = vmatpush.msra.mxu0 0.0
      %1753 = vmatpush.msra.mxu0 0.0
      %1754 = vmatpush.msra.mxu0 0.0
      %1755 = vmatpush.msra.mxu0 %v1731
      %1756 = vmatpush.msra.mxu0 %v1730
      %1757 = vmatmul.f32.gmra.mxu0 %v1736
      %v1758 = vpop.f32.mrf.mxu0
      %v1759 = vadd.f32 0.0, %v1758
      %1760 = vmatmul.f32.gmra.mxu0 %v1739
      %v1761 = vpop.f32.mrf.mxu0
      %v1762 = vadd.f32 0.0, %v1761
      %1763 = vdwg.mxu0
      %1764 = vmatpush.msra.mxu0 0.0
      %1765 = vmatpush.msra.mxu0 0.0
      %1766 = vmatpush.msra.mxu0 0.0
      %1767 = vmatpush.msra.mxu0 0.0
      %1768 = vmatpush.msra.mxu0 0.0
      %1769 = vmatpush.msra.mxu0 0.0
      %1770 = vmatpush.msra.mxu0 0.0
      %1771 = vmatpush.msra.mxu0 0.0
      %1772 = vmatpush.msra.mxu0 0.0
      %1773 = vmatpush.msra.mxu0 0.0
      %1774 = vmatpush.msra.mxu0 0.0
      %1775 = vmatpush.msra.mxu0 0.0
      %1776 = vmatpush.msra.mxu0 0.0
      %1777 = vmatpush.msra.mxu0 0.0
      %1778 = vmatpush.msra.mxu0 %v1729
      %1779 = vmatpush.msra.mxu0 %v1728
      %1780 = vmatmul.f32.gmra.mxu0 %v1736
      %v1781 = vpop.f32.mrf.mxu0
      %v1782 = vadd.f32 0.0, %v1781
      %1783 = vmatmul.f32.gmra.mxu0 %v1739
      %v1784 = vpop.f32.mrf.mxu0
      %v1785 = vadd.f32 0.0, %v1784
      %1786 = vdwg.mxu0
      %v1787 = vmul.f32 %v1759, %v408
      %v1788 = vmul.f32 %v1782, %v409
      %v1789 = vmul.f32 %v1762, %v408
      %v1790 = vmul.f32 %v1785, %v409
      %v1791 = vadd.f32 %v1716, %v1787
      %v1792 = vadd.f32 %v1717, %v1788
      %v1793 = vadd.f32 %v1718, %v1789
      %v1794 = vadd.f32 %v1719, %v1790
      %1795 = vrot.lane.b32.xlu0 %v1641, 15
      %v1796 = vpop.permute.xlu0 %1795
      %1797 = vrot.lane.b32.xlu0 %v1643, 15
      %v1798 = vpop.permute.xlu0 %1797
      %1799 = vrot.lane.b32.xlu0 %v1642, 15
      %v1800 = vpop.permute.xlu0 %1799
      %1801 = vrot.lane.b32.xlu0 %v1644, 15
      %v1802 = vpop.permute.xlu0 %1801
      %v1803 = vsel %vm426, %v1796, %v1800
      %v1804 = vsel %vm426, %v1798, %v1802
      %v1805 = vsel %vm426, %v1800, %v1796
      %v1806 = vsel %vm426, %v1802, %v1798
      %s1807 = scalar_lea.vmem %s1, 320
      %v1808 = vld [vmem:[%s1807] sm:$0xff]
      %v1809 = vld [vmem:[%s1807 + $0x8] sm:$0xff]
      %v1811 = vsel %vm277, %v1808, 0
      %v1814 = vsel %vm277, %v1809, 0
      %1816 = vmatpush.msra.mxu0 0.0
      %1817 = vmatpush.msra.mxu0 0.0
      %1818 = vmatpush.msra.mxu0 0.0
      %1819 = vmatpush.msra.mxu0 0.0
      %1820 = vmatpush.msra.mxu0 0.0
      %1821 = vmatpush.msra.mxu0 0.0
      %1822 = vmatpush.msra.mxu0 0.0
      %1823 = vmatpush.msra.mxu0 0.0
      %1824 = vmatpush.msra.mxu0 0.0
      %1825 = vmatpush.msra.mxu0 0.0
      %1826 = vmatpush.msra.mxu0 0.0
      %1827 = vmatpush.msra.mxu0 0.0
      %1828 = vmatpush.msra.mxu0 0.0
      %1829 = vmatpush.msra.mxu0 0.0
      %1830 = vmatpush.msra.mxu0 %v1806
      %1831 = vmatpush.msra.mxu0 %v1805
      %1832 = vmatmul.f32.gmra.mxu0 %v1811
      %v1833 = vpop.f32.mrf.mxu0
      %v1834 = vadd.f32 0.0, %v1833
      %1835 = vmatmul.f32.gmra.mxu0 %v1814
      %v1836 = vpop.f32.mrf.mxu0
      %v1837 = vadd.f32 0.0, %v1836
      %1838 = vdwg.mxu0
      %1839 = vmatpush.msra.mxu0 0.0
      %1840 = vmatpush.msra.mxu0 0.0
      %1841 = vmatpush.msra.mxu0 0.0
      %1842 = vmatpush.msra.mxu0 0.0
      %1843 = vmatpush.msra.mxu0 0.0
      %1844 = vmatpush.msra.mxu0 0.0
      %1845 = vmatpush.msra.mxu0 0.0
      %1846 = vmatpush.msra.mxu0 0.0
      %1847 = vmatpush.msra.mxu0 0.0
      %1848 = vmatpush.msra.mxu0 0.0
      %1849 = vmatpush.msra.mxu0 0.0
      %1850 = vmatpush.msra.mxu0 0.0
      %1851 = vmatpush.msra.mxu0 0.0
      %1852 = vmatpush.msra.mxu0 0.0
      %1853 = vmatpush.msra.mxu0 %v1804
      %1854 = vmatpush.msra.mxu0 %v1803
      %1855 = vmatmul.f32.gmra.mxu0 %v1811
      %v1856 = vpop.f32.mrf.mxu0
      %v1857 = vadd.f32 0.0, %v1856
      %1858 = vmatmul.f32.gmra.mxu0 %v1814
      %v1859 = vpop.f32.mrf.mxu0
      %v1860 = vadd.f32 0.0, %v1859
      %1861 = vdwg.mxu0
      %v1862 = vmul.f32 %v1834, %v486
      %v1863 = vmul.f32 %v1857, %v487
      %v1864 = vmul.f32 %v1837, %v486
      %v1865 = vmul.f32 %v1860, %v487
      %v1866 = vadd.f32 %v1791, %v1862
      %v1867 = vadd.f32 %v1792, %v1863
      %v1868 = vadd.f32 %v1793, %v1864
      %v1869 = vadd.f32 %v1794, %v1865
      %1870 = vrot.lane.b32.xlu0 %v1641, 1
      %v1871 = vpop.permute.xlu0 %1870
      %1872 = vrot.lane.b32.xlu0 %v1643, 1
      %v1873 = vpop.permute.xlu0 %1872
      %1874 = vrot.lane.b32.xlu0 %v1642, 1
      %v1875 = vpop.permute.xlu0 %1874
      %1876 = vrot.lane.b32.xlu0 %v1644, 1
      %v1877 = vpop.permute.xlu0 %1876
      %v1878 = vsel %vm504, %v1871, %v1875
      %v1879 = vsel %vm504, %v1873, %v1877
      %v1880 = vsel %vm504, %v1875, %v1871
      %v1881 = vsel %vm504, %v1877, %v1873
      %s1882 = scalar_lea.vmem %s1, 336
      %v1883 = vld [vmem:[%s1882] sm:$0xff]
      %v1884 = vld [vmem:[%s1882 + $0x8] sm:$0xff]
      %v1886 = vsel %vm277, %v1883, 0
      %v1889 = vsel %vm277, %v1884, 0
      %1891 = vmatpush.msra.mxu0 0.0
      %1892 = vmatpush.msra.mxu0 0.0
      %1893 = vmatpush.msra.mxu0 0.0
      %1894 = vmatpush.msra.mxu0 0.0
      %1895 = vmatpush.msra.mxu0 0.0
      %1896 = vmatpush.msra.mxu0 0.0
      %1897 = vmatpush.msra.mxu0 0.0
      %1898 = vmatpush.msra.mxu0 0.0
      %1899 = vmatpush.msra.mxu0 0.0
      %1900 = vmatpush.msra.mxu0 0.0
      %1901 = vmatpush.msra.mxu0 0.0
      %1902 = vmatpush.msra.mxu0 0.0
      %1903 = vmatpush.msra.mxu0 0.0
      %1904 = vmatpush.msra.mxu0 0.0
      %1905 = vmatpush.msra.mxu0 %v1881
      %1906 = vmatpush.msra.mxu0 %v1880
      %1907 = vmatmul.f32.gmra.mxu0 %v1886
      %v1908 = vpop.f32.mrf.mxu0
      %v1909 = vadd.f32 0.0, %v1908
      %1910 = vmatmul.f32.gmra.mxu0 %v1889
      %v1911 = vpop.f32.mrf.mxu0
      %v1912 = vadd.f32 0.0, %v1911
      %1913 = vdwg.mxu0
      %1914 = vmatpush.msra.mxu0 0.0
      %1915 = vmatpush.msra.mxu0 0.0
      %1916 = vmatpush.msra.mxu0 0.0
      %1917 = vmatpush.msra.mxu0 0.0
      %1918 = vmatpush.msra.mxu0 0.0
      %1919 = vmatpush.msra.mxu0 0.0
      %1920 = vmatpush.msra.mxu0 0.0
      %1921 = vmatpush.msra.mxu0 0.0
      %1922 = vmatpush.msra.mxu0 0.0
      %1923 = vmatpush.msra.mxu0 0.0
      %1924 = vmatpush.msra.mxu0 0.0
      %1925 = vmatpush.msra.mxu0 0.0
      %1926 = vmatpush.msra.mxu0 0.0
      %1927 = vmatpush.msra.mxu0 0.0
      %1928 = vmatpush.msra.mxu0 %v1879
      %1929 = vmatpush.msra.mxu0 %v1878
      %1930 = vmatmul.f32.gmra.mxu0 %v1886
      %v1931 = vpop.f32.mrf.mxu0
      %v1932 = vadd.f32 0.0, %v1931
      %1933 = vmatmul.f32.gmra.mxu0 %v1889
      %v1934 = vpop.f32.mrf.mxu0
      %v1935 = vadd.f32 0.0, %v1934
      %1936 = vdwg.mxu0
      %v1937 = vmul.f32 %v1909, %v564
      %v1938 = vmul.f32 %v1932, %v565
      %v1939 = vmul.f32 %v1912, %v564
      %v1940 = vmul.f32 %v1935, %v565
      %v1941 = vadd.f32 %v1866, %v1937
      %v1942 = vadd.f32 %v1867, %v1938
      %v1943 = vadd.f32 %v1868, %v1939
      %v1944 = vadd.f32 %v1869, %v1940
      %s1945 = scalar_lea.vmem %s1, 352
      %v1946 = vld [vmem:[%s1945] sm:$0xff]
      %v1947 = vld [vmem:[%s1945 + $0x8] sm:$0xff]
      %v1949 = vsel %vm277, %v1946, 0
      %v1952 = vsel %vm277, %v1947, 0
      %1954 = vmatpush.msra.mxu0 0.0
      %1955 = vmatpush.msra.mxu0 0.0
      %1956 = vmatpush.msra.mxu0 0.0
      %1957 = vmatpush.msra.mxu0 0.0
      %1958 = vmatpush.msra.mxu0 0.0
      %1959 = vmatpush.msra.mxu0 0.0
      %1960 = vmatpush.msra.mxu0 0.0
      %1961 = vmatpush.msra.mxu0 0.0
      %1962 = vmatpush.msra.mxu0 0.0
      %1963 = vmatpush.msra.mxu0 0.0
      %1964 = vmatpush.msra.mxu0 0.0
      %1965 = vmatpush.msra.mxu0 0.0
      %1966 = vmatpush.msra.mxu0 0.0
      %1967 = vmatpush.msra.mxu0 0.0
      %1968 = vmatpush.msra.mxu0 %v1643
      %1969 = vmatpush.msra.mxu0 %v1641
      %1970 = vmatmul.f32.gmra.mxu0 %v1949
      %v1971 = vpop.f32.mrf.mxu0
      %v1972 = vadd.f32 0.0, %v1971
      %1973 = vmatmul.f32.gmra.mxu0 %v1952
      %v1974 = vpop.f32.mrf.mxu0
      %v1975 = vadd.f32 0.0, %v1974
      %1976 = vdwg.mxu0
      %1977 = vmatpush.msra.mxu0 0.0
      %1978 = vmatpush.msra.mxu0 0.0
      %1979 = vmatpush.msra.mxu0 0.0
      %1980 = vmatpush.msra.mxu0 0.0
      %1981 = vmatpush.msra.mxu0 0.0
      %1982 = vmatpush.msra.mxu0 0.0
      %1983 = vmatpush.msra.mxu0 0.0
      %1984 = vmatpush.msra.mxu0 0.0
      %1985 = vmatpush.msra.mxu0 0.0
      %1986 = vmatpush.msra.mxu0 0.0
      %1987 = vmatpush.msra.mxu0 0.0
      %1988 = vmatpush.msra.mxu0 0.0
      %1989 = vmatpush.msra.mxu0 0.0
      %1990 = vmatpush.msra.mxu0 0.0
      %1991 = vmatpush.msra.mxu0 %v1644
      %1992 = vmatpush.msra.mxu0 %v1642
      %1993 = vmatmul.f32.gmra.mxu0 %v1949
      %v1994 = vpop.f32.mrf.mxu0
      %v1995 = vadd.f32 0.0, %v1994
      %1996 = vmatmul.f32.gmra.mxu0 %v1952
      %v1997 = vpop.f32.mrf.mxu0
      %v1998 = vadd.f32 0.0, %v1997
      %1999 = vdwg.mxu0
      %v2000 = vadd.f32 %v1941, %v1972
      %v2001 = vadd.f32 %v1942, %v1995
      %v2002 = vadd.f32 %v1943, %v1975
      %v2003 = vadd.f32 %v1944, %v1998
      %2004 = vrot.lane.b32.xlu0 %v1641, 127
      %v2005 = vpop.permute.xlu0 %2004
      %2006 = vrot.lane.b32.xlu0 %v1643, 127
      %v2007 = vpop.permute.xlu0 %2006
      %2008 = vrot.lane.b32.xlu0 %v1642, 127
      %v2009 = vpop.permute.xlu0 %2008
      %2010 = vrot.lane.b32.xlu0 %v1644, 127
      %v2011 = vpop.permute.xlu0 %2010
      %v2012 = vsel %vm641, %v2005, %v2009
      %v2013 = vsel %vm641, %v2007, %v2011
      %v2014 = vsel %vm641, %v2009, %v2005
      %v2015 = vsel %vm641, %v2011, %v2007
      %s2016 = scalar_lea.vmem %s1, 368
      %v2017 = vld [vmem:[%s2016] sm:$0xff]
      %v2018 = vld [vmem:[%s2016 + $0x8] sm:$0xff]
      %v2020 = vsel %vm277, %v2017, 0
      %v2023 = vsel %vm277, %v2018, 0
      %2025 = vmatpush.msra.mxu0 0.0
      %2026 = vmatpush.msra.mxu0 0.0
      %2027 = vmatpush.msra.mxu0 0.0
      %2028 = vmatpush.msra.mxu0 0.0
      %2029 = vmatpush.msra.mxu0 0.0
      %2030 = vmatpush.msra.mxu0 0.0
      %2031 = vmatpush.msra.mxu0 0.0
      %2032 = vmatpush.msra.mxu0 0.0
      %2033 = vmatpush.msra.mxu0 0.0
      %2034 = vmatpush.msra.mxu0 0.0
      %2035 = vmatpush.msra.mxu0 0.0
      %2036 = vmatpush.msra.mxu0 0.0
      %2037 = vmatpush.msra.mxu0 0.0
      %2038 = vmatpush.msra.mxu0 0.0
      %2039 = vmatpush.msra.mxu0 %v2013
      %2040 = vmatpush.msra.mxu0 %v2012
      %2041 = vmatmul.f32.gmra.mxu0 %v2020
      %v2042 = vpop.f32.mrf.mxu0
      %v2043 = vadd.f32 0.0, %v2042
      %2044 = vmatmul.f32.gmra.mxu0 %v2023
      %v2045 = vpop.f32.mrf.mxu0
      %v2046 = vadd.f32 0.0, %v2045
      %2047 = vdwg.mxu0
      %2048 = vmatpush.msra.mxu0 0.0
      %2049 = vmatpush.msra.mxu0 0.0
      %2050 = vmatpush.msra.mxu0 0.0
      %2051 = vmatpush.msra.mxu0 0.0
      %2052 = vmatpush.msra.mxu0 0.0
      %2053 = vmatpush.msra.mxu0 0.0
      %2054 = vmatpush.msra.mxu0 0.0
      %2055 = vmatpush.msra.mxu0 0.0
      %2056 = vmatpush.msra.mxu0 0.0
      %2057 = vmatpush.msra.mxu0 0.0
      %2058 = vmatpush.msra.mxu0 0.0
      %2059 = vmatpush.msra.mxu0 0.0
      %2060 = vmatpush.msra.mxu0 0.0
      %2061 = vmatpush.msra.mxu0 0.0
      %2062 = vmatpush.msra.mxu0 %v2015
      %2063 = vmatpush.msra.mxu0 %v2014
      %2064 = vmatmul.f32.gmra.mxu0 %v2020
      %v2065 = vpop.f32.mrf.mxu0
      %v2066 = vadd.f32 0.0, %v2065
      %2067 = vmatmul.f32.gmra.mxu0 %v2023
      %v2068 = vpop.f32.mrf.mxu0
      %v2069 = vadd.f32 0.0, %v2068
      %2070 = vdwg.mxu0
      %v2071 = vmul.f32 %v2043, %v701
      %v2072 = vmul.f32 %v2066, %v702
      %v2073 = vmul.f32 %v2046, %v701
      %v2074 = vmul.f32 %v2069, %v702
      %v2075 = vadd.f32 %v2000, %v2071
      %v2076 = vadd.f32 %v2001, %v2072
      %v2077 = vadd.f32 %v2002, %v2073
      %v2078 = vadd.f32 %v2003, %v2074
      %2079 = vrot.lane.b32.xlu0 %v1641, 113
      %v2080 = vpop.permute.xlu0 %2079
      %2081 = vrot.lane.b32.xlu0 %v1643, 113
      %v2082 = vpop.permute.xlu0 %2081
      %2083 = vrot.lane.b32.xlu0 %v1642, 113
      %v2084 = vpop.permute.xlu0 %2083
      %2085 = vrot.lane.b32.xlu0 %v1644, 113
      %v2086 = vpop.permute.xlu0 %2085
      %v2087 = vsel %vm719, %v2080, %v2084
      %v2088 = vsel %vm719, %v2082, %v2086
      %v2089 = vsel %vm719, %v2084, %v2080
      %v2090 = vsel %vm719, %v2086, %v2082
      %s2091 = scalar_lea.vmem %s1, 384
      %v2092 = vld [vmem:[%s2091] sm:$0xff]
      %v2093 = vld [vmem:[%s2091 + $0x8] sm:$0xff]
      %v2095 = vsel %vm277, %v2092, 0
      %v2098 = vsel %vm277, %v2093, 0
      %2100 = vmatpush.msra.mxu0 0.0
      %2101 = vmatpush.msra.mxu0 0.0
      %2102 = vmatpush.msra.mxu0 0.0
      %2103 = vmatpush.msra.mxu0 0.0
      %2104 = vmatpush.msra.mxu0 0.0
      %2105 = vmatpush.msra.mxu0 0.0
      %2106 = vmatpush.msra.mxu0 0.0
      %2107 = vmatpush.msra.mxu0 0.0
      %2108 = vmatpush.msra.mxu0 0.0
      %2109 = vmatpush.msra.mxu0 0.0
      %2110 = vmatpush.msra.mxu0 0.0
      %2111 = vmatpush.msra.mxu0 0.0
      %2112 = vmatpush.msra.mxu0 0.0
      %2113 = vmatpush.msra.mxu0 0.0
      %2114 = vmatpush.msra.mxu0 %v2088
      %2115 = vmatpush.msra.mxu0 %v2087
      %2116 = vmatmul.f32.gmra.mxu0 %v2095
      %v2117 = vpop.f32.mrf.mxu0
      %v2118 = vadd.f32 0.0, %v2117
      %2119 = vmatmul.f32.gmra.mxu0 %v2098
      %v2120 = vpop.f32.mrf.mxu0
      %v2121 = vadd.f32 0.0, %v2120
      %2122 = vdwg.mxu0
      %2123 = vmatpush.msra.mxu0 0.0
      %2124 = vmatpush.msra.mxu0 0.0
      %2125 = vmatpush.msra.mxu0 0.0
      %2126 = vmatpush.msra.mxu0 0.0
      %2127 = vmatpush.msra.mxu0 0.0
      %2128 = vmatpush.msra.mxu0 0.0
      %2129 = vmatpush.msra.mxu0 0.0
      %2130 = vmatpush.msra.mxu0 0.0
      %2131 = vmatpush.msra.mxu0 0.0
      %2132 = vmatpush.msra.mxu0 0.0
      %2133 = vmatpush.msra.mxu0 0.0
      %2134 = vmatpush.msra.mxu0 0.0
      %2135 = vmatpush.msra.mxu0 0.0
      %2136 = vmatpush.msra.mxu0 0.0
      %2137 = vmatpush.msra.mxu0 %v2090
      %2138 = vmatpush.msra.mxu0 %v2089
      %2139 = vmatmul.f32.gmra.mxu0 %v2095
      %v2140 = vpop.f32.mrf.mxu0
      %v2141 = vadd.f32 0.0, %v2140
      %2142 = vmatmul.f32.gmra.mxu0 %v2098
      %v2143 = vpop.f32.mrf.mxu0
      %v2144 = vadd.f32 0.0, %v2143
      %2145 = vdwg.mxu0
      %v2146 = vmul.f32 %v2118, %v779
      %v2147 = vmul.f32 %v2141, %v780
      %v2148 = vmul.f32 %v2121, %v779
      %v2149 = vmul.f32 %v2144, %v780
      %v2150 = vadd.f32 %v2075, %v2146
      %v2151 = vadd.f32 %v2076, %v2147
      %v2152 = vadd.f32 %v2077, %v2148
      %v2153 = vadd.f32 %v2078, %v2149
      %2154 = vrot.lane.b32.xlu0 %v1641, 112
      %v2155 = vpop.permute.xlu0 %2154
      %2156 = vrot.lane.b32.xlu0 %v1643, 112
      %v2157 = vpop.permute.xlu0 %2156
      %2158 = vrot.lane.b32.xlu0 %v1642, 112
      %v2159 = vpop.permute.xlu0 %2158
      %2160 = vrot.lane.b32.xlu0 %v1644, 112
      %v2161 = vpop.permute.xlu0 %2160
      %v2162 = vsel %vm797, %v2155, %v2159
      %v2163 = vsel %vm797, %v2157, %v2161
      %v2164 = vsel %vm797, %v2159, %v2155
      %v2165 = vsel %vm797, %v2161, %v2157
      %s2166 = scalar_lea.vmem %s1, 400
      %v2167 = vld [vmem:[%s2166] sm:$0xff]
      %v2168 = vld [vmem:[%s2166 + $0x8] sm:$0xff]
      %v2170 = vsel %vm277, %v2167, 0
      %v2173 = vsel %vm277, %v2168, 0
      %2175 = vmatpush.msra.mxu0 0.0
      %2176 = vmatpush.msra.mxu0 0.0
      %2177 = vmatpush.msra.mxu0 0.0
      %2178 = vmatpush.msra.mxu0 0.0
      %2179 = vmatpush.msra.mxu0 0.0
      %2180 = vmatpush.msra.mxu0 0.0
      %2181 = vmatpush.msra.mxu0 0.0
      %2182 = vmatpush.msra.mxu0 0.0
      %2183 = vmatpush.msra.mxu0 0.0
      %2184 = vmatpush.msra.mxu0 0.0
      %2185 = vmatpush.msra.mxu0 0.0
      %2186 = vmatpush.msra.mxu0 0.0
      %2187 = vmatpush.msra.mxu0 0.0
      %2188 = vmatpush.msra.mxu0 0.0
      %2189 = vmatpush.msra.mxu0 %v2163
      %2190 = vmatpush.msra.mxu0 %v2162
      %2191 = vmatmul.f32.gmra.mxu0 %v2170
      %v2192 = vpop.f32.mrf.mxu0
      %v2193 = vadd.f32 0.0, %v2192
      %2194 = vmatmul.f32.gmra.mxu0 %v2173
      %v2195 = vpop.f32.mrf.mxu0
      %v2196 = vadd.f32 0.0, %v2195
      %2197 = vdwg.mxu0
      %2198 = vmatpush.msra.mxu0 0.0
      %2199 = vmatpush.msra.mxu0 0.0
      %2200 = vmatpush.msra.mxu0 0.0
      %2201 = vmatpush.msra.mxu0 0.0
      %2202 = vmatpush.msra.mxu0 0.0
      %2203 = vmatpush.msra.mxu0 0.0
      %2204 = vmatpush.msra.mxu0 0.0
      %2205 = vmatpush.msra.mxu0 0.0
      %2206 = vmatpush.msra.mxu0 0.0
      %2207 = vmatpush.msra.mxu0 0.0
      %2208 = vmatpush.msra.mxu0 0.0
      %2209 = vmatpush.msra.mxu0 0.0
      %2210 = vmatpush.msra.mxu0 0.0
      %2211 = vmatpush.msra.mxu0 0.0
      %2212 = vmatpush.msra.mxu0 %v2165
      %2213 = vmatpush.msra.mxu0 %v2164
      %2214 = vmatmul.f32.gmra.mxu0 %v2170
      %v2215 = vpop.f32.mrf.mxu0
      %v2216 = vadd.f32 0.0, %v2215
      %2217 = vmatmul.f32.gmra.mxu0 %v2173
      %v2218 = vpop.f32.mrf.mxu0
      %v2219 = vadd.f32 0.0, %v2218
      %2220 = vdwg.mxu0
      %v2221 = vmul.f32 %v2193, %v857
      %v2222 = vmul.f32 %v2216, %v858
      %v2223 = vmul.f32 %v2196, %v857
      %v2224 = vmul.f32 %v2219, %v858
      %v2225 = vadd.f32 %v2150, %v2221
      %v2226 = vadd.f32 %v2151, %v2222
      %v2227 = vadd.f32 %v2152, %v2223
      %v2228 = vadd.f32 %v2153, %v2224
      %2229 = vrot.lane.b32.xlu0 %v1641, 111
      %v2230 = vpop.permute.xlu0 %2229
      %2231 = vrot.lane.b32.xlu0 %v1643, 111
      %v2232 = vpop.permute.xlu0 %2231
      %2233 = vrot.lane.b32.xlu0 %v1642, 111
      %v2234 = vpop.permute.xlu0 %2233
      %2235 = vrot.lane.b32.xlu0 %v1644, 111
      %v2236 = vpop.permute.xlu0 %2235
      %v2237 = vsel %vm875, %v2230, %v2234
      %v2238 = vsel %vm875, %v2232, %v2236
      %v2239 = vsel %vm875, %v2234, %v2230
      %v2240 = vsel %vm875, %v2236, %v2232
      %s2241 = scalar_lea.vmem %s1, 416
      %v2242 = vld [vmem:[%s2241] sm:$0xff]
      %v2243 = vld [vmem:[%s2241 + $0x8] sm:$0xff]
      %v2245 = vsel %vm277, %v2242, 0
      %v2248 = vsel %vm277, %v2243, 0
      %2250 = vmatpush.msra.mxu0 0.0
      %2251 = vmatpush.msra.mxu0 0.0
      %2252 = vmatpush.msra.mxu0 0.0
      %2253 = vmatpush.msra.mxu0 0.0
      %2254 = vmatpush.msra.mxu0 0.0
      %2255 = vmatpush.msra.mxu0 0.0
      %2256 = vmatpush.msra.mxu0 0.0
      %2257 = vmatpush.msra.mxu0 0.0
      %2258 = vmatpush.msra.mxu0 0.0
      %2259 = vmatpush.msra.mxu0 0.0
      %2260 = vmatpush.msra.mxu0 0.0
      %2261 = vmatpush.msra.mxu0 0.0
      %2262 = vmatpush.msra.mxu0 0.0
      %2263 = vmatpush.msra.mxu0 0.0
      %2264 = vmatpush.msra.mxu0 %v2238
      %2265 = vmatpush.msra.mxu0 %v2237
      %2266 = vmatmul.f32.gmra.mxu0 %v2245
      %v2267 = vpop.f32.mrf.mxu0
      %v2268 = vadd.f32 0.0, %v2267
      %2269 = vmatmul.f32.gmra.mxu0 %v2248
      %v2270 = vpop.f32.mrf.mxu0
      %v2271 = vadd.f32 0.0, %v2270
      %2272 = vdwg.mxu0
      %2273 = vmatpush.msra.mxu0 0.0
      %2274 = vmatpush.msra.mxu0 0.0
      %2275 = vmatpush.msra.mxu0 0.0
      %2276 = vmatpush.msra.mxu0 0.0
      %2277 = vmatpush.msra.mxu0 0.0
      %2278 = vmatpush.msra.mxu0 0.0
      %2279 = vmatpush.msra.mxu0 0.0
      %2280 = vmatpush.msra.mxu0 0.0
      %2281 = vmatpush.msra.mxu0 0.0
      %2282 = vmatpush.msra.mxu0 0.0
      %2283 = vmatpush.msra.mxu0 0.0
      %2284 = vmatpush.msra.mxu0 0.0
      %2285 = vmatpush.msra.mxu0 0.0
      %2286 = vmatpush.msra.mxu0 0.0
      %2287 = vmatpush.msra.mxu0 %v2240
      %2288 = vmatpush.msra.mxu0 %v2239
      %2289 = vmatmul.f32.gmra.mxu0 %v2245
      %v2290 = vpop.f32.mrf.mxu0
      %v2291 = vadd.f32 0.0, %v2290
      %2292 = vmatmul.f32.gmra.mxu0 %v2248
      %v2293 = vpop.f32.mrf.mxu0
      %v2294 = vadd.f32 0.0, %v2293
      %2295 = vdwg.mxu0
      %v2296 = vmul.f32 %v2268, %v935
      %v2297 = vmul.f32 %v2291, %v936
      %v2298 = vmul.f32 %v2271, %v935
      %v2299 = vmul.f32 %v2294, %v936
      %v2300 = vadd.f32 %v2225, %v2296
      %v2301 = vadd.f32 %v2226, %v2297
      %v2302 = vadd.f32 %v2227, %v2298
      %v2303 = vadd.f32 %v2228, %v2299
      %s2304 = scalar_lea.vmem %s2, 32
      %v2305 = vld [vmem:[%s2304] sm:$0xff]
      %v2306 = vld [vmem:[%s2304 + $0x8] sm:$0xff]
      %2308 = vset.pattern.permute.xlu0 0
      %2309 = vperm.xlu0 %2308, %v2305
      %v2310 = vpop.permute.xlu0 %2309
      %2313 = vset.pattern.permute.xlu0 0
      %2314 = vperm.xlu0 %2313, %v2306
      %v2315 = vpop.permute.xlu0 %2314
      %v2317 = vadd.f32 %v2300, %v2310
      %v2318 = vadd.f32 %v2301, %v2310
      %v2319 = vadd.f32 %v2302, %v2315
      %v2320 = vadd.f32 %v2303, %v2315
      %v2321 = vmax.f32 %v2317, 0.0
      %v2322 = vmax.f32 %v2318, 0.0
      %v2323 = vmax.f32 %v2319, 0.0
      %v2324 = vmax.f32 %v2320, 0.0
      %v2325 = vld [vmem:[%s3] sm:$0xff]
      %v2326 = vld [vmem:[%s3 + $0x8] sm:$0x3]
      %v2328 = vsel %vm277, %v2325, 0
      %v2331 = vsel %vm277, %v2326, 0
      %2333 = vmatpush.msra.mxu0 0.0
      %2334 = vmatpush.msra.mxu0 0.0
      %2335 = vmatpush.msra.mxu0 0.0
      %2336 = vmatpush.msra.mxu0 0.0
      %2337 = vmatpush.msra.mxu0 0.0
      %2338 = vmatpush.msra.mxu0 0.0
      %2339 = vmatpush.msra.mxu0 0.0
      %2340 = vmatpush.msra.mxu0 0.0
      %2341 = vmatpush.msra.mxu0 0.0
      %2342 = vmatpush.msra.mxu0 0.0
      %2343 = vmatpush.msra.mxu0 0.0
      %2344 = vmatpush.msra.mxu0 0.0
      %2345 = vmatpush.msra.mxu0 0.0
      %2346 = vmatpush.msra.mxu0 0.0
      %2347 = vmatpush.msra.mxu0 %v2323
      %2348 = vmatpush.msra.mxu0 %v2321
      %2349 = vmatmul.f32.gmra.mxu0 %v2328
      %v2350 = vpop.f32.mrf.mxu0
      %v2351 = vadd.f32 0.0, %v2350
      %2352 = vmatmul.f32.gmra.mxu0 %v2331
      %v2353 = vpop.f32.mrf.mxu0
      %v2354 = vadd.f32 0.0, %v2353
      %2355 = vdwg.mxu0
      %2356 = vmatpush.msra.mxu0 0.0
      %2357 = vmatpush.msra.mxu0 0.0
      %2358 = vmatpush.msra.mxu0 0.0
      %2359 = vmatpush.msra.mxu0 0.0
      %2360 = vmatpush.msra.mxu0 0.0
      %2361 = vmatpush.msra.mxu0 0.0
      %2362 = vmatpush.msra.mxu0 0.0
      %2363 = vmatpush.msra.mxu0 0.0
      %2364 = vmatpush.msra.mxu0 0.0
      %2365 = vmatpush.msra.mxu0 0.0
      %2366 = vmatpush.msra.mxu0 0.0
      %2367 = vmatpush.msra.mxu0 0.0
      %2368 = vmatpush.msra.mxu0 0.0
      %2369 = vmatpush.msra.mxu0 0.0
      %2370 = vmatpush.msra.mxu0 %v2324
      %2371 = vmatpush.msra.mxu0 %v2322
      %2372 = vmatmul.f32.gmra.mxu0 %v2328
      %v2373 = vpop.f32.mrf.mxu0
      %v2374 = vadd.f32 0.0, %v2373
      %2375 = vmatmul.f32.gmra.mxu0 %v2331
      %v2376 = vpop.f32.mrf.mxu0
      %v2377 = vadd.f32 0.0, %v2376
      %2378 = vdwg.mxu0
      %v2379 = vadd.f32 %v2351, %v2374
      %2380 = vadd.xlane.f32.xlu0 %v2379
      %v2381 = vpop.xlane.xlu0 %2380
      %vm2382 = vcmask 1041408
      %v2383 = vsel %vm2382, %v2354, 0.0
      %v2384 = vsel %vm2382, %v2377, 0.0
      %v2385 = vadd.f32 %v2383, %v2384
      %2386 = vadd.xlane.f32.xlu0 %v2385
      %v2387 = vpop.xlane.xlu0 %2386
      %v2388 = vld [vmem:[%s4] sm:$0xff]
      %v2389 = vld [vmem:[%s4 + $0x8] sm:$0x3]
      %v2390 = vadd.f32 %v2381, %v2388
      %v2391 = vadd.f32 %v2387, %v2389
      %vm2392 = vcmask 7168
      %2393 = vst.msk [vmem:[%s251] sm:$0xff] %vm2392, %v2390
      %vm2394 = vcmask 1024
      %2395 = vst.msk [vmem:[%s251 + $0x8] sm:$0x3] %vm2394, %v2391
      %p2396 = scmp.lt.s32.totalorder %s17, 1
      %s2397 = scalar_select %p2396, %s17, 1
      %s2398 = smul.addr %s2397, 2
      %s2399 = smul.addr %s2398, 8
      %s2400 = scalar_lea.vmem %s6, %s2399
      // Predicated region
      $region45: #{threec_forward.1} parent=43 // pred_check
        %p2401 = pneg %p166
      $region46: #{threec_forward.1} parent=43 // pred_check_branch
        %2403 = sbr.rel (%p2401) target = $region48
      $region47: #{threec_forward.1} parent=43 // pred_region
        _
      $region48: #{threec_forward.1} parent=43 // pred_fallthru
        _
    $region44: #{threec_forward.1} parent=5 // pred_fallthru
      _
    %p2404 = scmp.le.s32.totalorder 2, %s12
    // Predicated region
    $region49: #{threec_forward.1} parent=5 // pred_check
      %p2405 = pneg %p2404
    $region50: #{threec_forward.1} parent=5 // pred_check_branch
      %2407 = sbr.rel (%p2405) target = $region52
    $region51: #{threec_forward.1} parent=5 // pred_region
      %s2408 = ssub.s32 %s12, 2
      // Predicated region
      $region53: #{threec_forward.1} parent=51 // pred_check
        %p2409 = pneg %p172
      $region54: #{threec_forward.1} parent=51 // pred_check_branch
        %2411 = sbr.rel (%p2409) target = $region56
      $region55: #{threec_forward.1} parent=51 // pred_region
        %p2412 = scmp.lt.s32.totalorder %s18, 1
        %s2413 = scalar_select %p2412, %s18, 1
        %s2414 = smul.addr %s2413, 2
        %s2415 = smul.addr %s2414, 8
        %s2416 = scalar_lea.vmem %s6, %s2415
      $region56: #{threec_forward.1} parent=51 // pred_fallthru
        _
    $region52: #{threec_forward.1} parent=5 // pred_fallthru
      _
  $region6: #{threec_forward.1} parent=0 // loop_footer
    %s16 = sadd.s32 1, %s12
  $region7: #{threec_forward.1} parent=0 // loop_footer_branch
    %11 = sbr.rel target = $region3
  $region8: #{threec_forward.1} parent=0 // loop_exit
    _

</llo_original>
